<compile_context>
chip_gen: v7x
topology: tpu7x:2x2x1
jax: 0.10.0
libtpu: 0.0.40
codegen_flags: <defaults>
</compile_context>

<pallas_src>
import functools

import numpy as np
import jax
import jax.numpy as jnp
from jax.experimental import pallas as pl
from jax.experimental.pallas import tpu as pltpu

EPS = 1e-5
LANE = 128


def _round_up(x, m):
    return (x + m - 1) // m * m


# ------------------------------- Pallas kernel ------------------------------ #
def _conv_bn_act_kernel(*refs, taps, m, apply_relu, has_residual):
    """Fused direct conv (static taps) + folded-BN (+ residual) (+ ReLU).

    refs (in order):
      x_ref     (P, L, Cin)      bf16 tap planes for one batch element
      w_ref     (KH*KW, Cin, TN) bf16 weights for this Cout tile
      scale_ref (1, TN)          f32 folded BN scale
      bias_ref  (1, TN)          f32 folded BN bias
      [res_ref] (1, M, TN)       f32 residual (only if has_residual)
      o_ref     (1, M, TN)       f32 output, M = Hout*Wout
    """
    if has_residual:
        x_ref, w_ref, scale_ref, bias_ref, res_ref, o_ref = refs
    else:
        x_ref, w_ref, scale_ref, bias_ref, o_ref = refs
        res_ref = None

    acc = None
    # Statically unrolled reduction over the (kh, kw) taps: each tap is one
    # bf16 x bf16 -> f32 MXU matmul on an aligned row window of its plane.
    for kidx, (p, r0) in enumerate(taps):
        xs = x_ref[p, r0:r0 + m, :]                              # (M, Cin) bf16
        part = jnp.dot(xs, w_ref[kidx],
                       preferred_element_type=jnp.float32)       # (M, TN) f32
        acc = part if acc is None else acc + part

    y = acc * scale_ref[...] + bias_ref[...]                     # f32 epilogue
    if res_ref is not None:
        y = y + res_ref[0]
    if apply_relu:
        y = jnp.maximum(y, 0.0)
    o_ref[0] = y.astype(o_ref.dtype)


# -------------------------- activation tap planes --------------------------- #
def build_tap_planes(x_nhwc, ksize, stride, dilation, padding):
    """Decompose the (zero-padded) activation into pre-shifted bf16 planes.

    For tap (kh, kw) with kh*dilation = qh*stride + rh, the plane keyed by
    (rh, kw) holds xp[n, rh + stride*i, kw*dilation + stride*j, c] flattened
    over (i, j) -> so the tap's contribution is rows [qh*Wout, qh*Wout + M) of
    that plane: a contiguous, Wout-aligned 2D slab -> clean in-kernel loads.
    """
    N, H, W, C = x_nhwc.shape
    Hout = (H + 2 * padding - dilation * (ksize - 1) - 1) // stride + 1
    Wout = (W + 2 * padding - dilation * (ksize - 1) - 1) // stride + 1
    qh_max = ((ksize - 1) * dilation) // stride
    Hplane = Hout + qh_max

    decomp = [((kh * dilation) % stride, (kh * dilation) // stride)
              for kh in range(ksize)]
    row_phases = []
    for rh, _ in decomp:
        if rh not in row_phases:
            row_phases.append(rh)

    plane_idx = {}
    planes_meta = []                       # (rh, kw) in plane order
    for rh in row_phases:
        for kw in range(ksize):
            plane_idx[(rh, kw)] = len(planes_meta)
            planes_meta.append((rh, kw))

    # tap kidx = kh*ksize + kw  ->  (plane index, row offset in the plane)
    taps = tuple((plane_idx[(decomp[kh][0], kw)], decomp[kh][1] * Wout)
                 for kh in range(ksize) for kw in range(ksize))

    # Pad so every row-phase plane exposes Hplane rows (extra rows never read).
    Hp = max(H + 2 * padding, stride * Hplane)
    xb = x_nhwc.astype(jnp.bfloat16)
    xp = jnp.pad(xb, ((0, 0),
                      (padding, Hp - H - padding),
                      (padding, padding),
                      (0, 0)))

    planes = []
    for (rh, kw) in planes_meta:
        pw = xp[:, rh::stride, kw * dilation::stride, :][:, :Hplane, :Wout, :]
        planes.append(pw.reshape(N, Hplane * Wout, C))
    P = len(planes)
    x_planes = jnp.stack(planes, axis=1).reshape(N * P, Hplane * Wout, C)
    return x_planes, taps, (Hout, Wout)


# ------------------------------ conv wrapper -------------------------------- #
def fused_conv_bn_act(x_nhwc, w_oihw, scale, bias, *, stride, dilation, padding,
                      residual=None, apply_relu=False):
    """conv(w) -> BN(scale, bias) [-> + residual] [-> ReLU], all in one kernel."""
    N = x_nhwc.shape[0]
    Cout, Cin, KH, KW = w_oihw.shape
    assert KH == KW, "square kernels only"

    x_planes, taps, (Hout, Wout) = build_tap_planes(
        x_nhwc, KH, stride, dilation, padding)
    NP, L, _ = x_planes.shape
    P = NP // N
    M = Hout * Wout

    # Lane-dense output (unmasked full-lane stores); tn matches the MXU tile.
    Cout_pad = _round_up(Cout, LANE)
    tn = 256 if Cout_pad % 256 == 0 else 128   # (v5e prefers 128; 256 on v6e/v7x)

    # Weights as (KH*KW, Cin, Cout_pad) bf16, tap-major to match `taps`.
    w_mat = jnp.transpose(w_oihw, (2, 3, 1, 0)).reshape(KH * KW, Cin, Cout)
    w_mat = jnp.pad(w_mat, ((0, 0), (0, 0), (0, Cout_pad - Cout))).astype(jnp.bfloat16)
    scale_p = jnp.pad(scale.astype(jnp.float32), (0, Cout_pad - Cout)).reshape(1, Cout_pad)
    bias_p = jnp.pad(bias.astype(jnp.float32), (0, Cout_pad - Cout)).reshape(1, Cout_pad)

    in_specs = [
        pl.BlockSpec((P, L, Cin), lambda n, j: (n, 0, 0)),          # tap planes
        pl.BlockSpec((KH * KW, Cin, tn), lambda n, j: (0, 0, j)),   # weights
        pl.BlockSpec((1, tn), lambda n, j: (0, j)),                 # BN scale
        pl.BlockSpec((1, tn), lambda n, j: (0, j)),                 # BN bias
    ]
    args = [x_planes, w_mat, scale_p, bias_p]

    has_res = residual is not None
    if has_res:
        res = residual.reshape(N, M, Cout).astype(jnp.float32)
        res = jnp.pad(res, ((0, 0), (0, 0), (0, Cout_pad - Cout)))
        in_specs.append(pl.BlockSpec((1, M, tn), lambda n, j: (n, 0, j)))
        args.append(res)

    kernel = functools.partial(
        _conv_bn_act_kernel, taps=taps, m=M,
        apply_relu=apply_relu, has_residual=has_res)

    out = pl.pallas_call(
        kernel,
        out_shape=jax.ShapeDtypeStruct((N, M, Cout_pad), jnp.float32),
        grid_spec=pltpu.PrefetchScalarGridSpec(
            num_scalar_prefetch=0,
            grid=(N, Cout_pad // tn),
            in_specs=in_specs,
            out_specs=pl.BlockSpec((1, M, tn), lambda n, j: (n, 0, j)),
        ),
        compiler_params=pltpu.CompilerParams(
            dimension_semantics=("parallel", "parallel"),
            vmem_limit_bytes=32 * 1024 * 1024),
    )(*args)

    return out[:, :, :Cout].reshape(N, Hout, Wout, Cout)


# --------------------------------- JAX glue --------------------------------- #
def fold_bn(gamma, beta, mean, var):
    scale = gamma / jnp.sqrt(var + EPS)
    bias = beta - mean * scale
    return scale, bias


def basic_block_forward(x_nchw, params, stride=1, dilation=1):
    """Pallas implementation of BasicBlock.forward (eval-mode BN). NCHW in/out."""
    x = jnp.transpose(x_nchw, (0, 2, 3, 1))                 # NCHW -> NHWC
    Cin = x.shape[-1]
    channels = params["w1"].shape[0]

    # conv1 -> bn1 -> relu
    s1, b1 = fold_bn(params["g1"], params["be1"], params["m1"], params["v1"])
    y1 = fused_conv_bn_act(x, params["w1"], s1, b1, stride=stride,
                           dilation=dilation, padding=dilation, apply_relu=True)

    # residual branch
    if stride != 1 or Cin != channels:
        sd, bd = fold_bn(params["gd"], params["bed"], params["md"], params["vd"])
        res = fused_conv_bn_act(x, params["wd"], sd, bd, stride=stride,
                                dilation=1, padding=0, apply_relu=False)
    else:
        res = x                                              # identity

    # conv2 -> bn2 -> (+residual) -> relu   (fused in one kernel)
    s2, b2 = fold_bn(params["g2"], params["be2"], params["m2"], params["v2"])
    out = fused_conv_bn_act(y1, params["w2"], s2, b2, stride=1,
                            dilation=dilation, padding=dilation,
                            residual=res, apply_relu=True)
    return jnp.transpose(out, (0, 3, 1, 2))                  # back to NCHW


# ---------------------------- pure-JAX reference ----------------------------- #
def reference_forward(x_nchw, params, stride=1, dilation=1):
    """XLA reference with matching precision (bf16 conv inputs, f32 accumulate)."""
    x = jnp.transpose(x_nchw, (0, 2, 3, 1))
    Cin = x.shape[-1]
    channels = params["w1"].shape[0]

    def conv(inp, w_oihw, s, d, pad):
        w_hwio = jnp.transpose(w_oihw, (2, 3, 1, 0)).astype(jnp.bfloat16)
        return jax.lax.conv_general_dilated(
            inp.astype(jnp.bfloat16), w_hwio, (s, s), [(pad, pad), (pad, pad)],
            rhs_dilation=(d, d), dimension_numbers=("NHWC", "HWIO", "NHWC"),
            preferred_element_type=jnp.float32)

    s1, b1 = fold_bn(params["g1"], params["be1"], params["m1"], params["v1"])
    y = jax.nn.relu(conv(x, params["w1"], stride, dilation, dilation) * s1 + b1)
    s2, b2 = fold_bn(params["g2"], params["be2"], params["m2"], params["v2"])
    y2 = conv(y, params["w2"], 1, dilation, dilation) * s2 + b2
    if stride != 1 or Cin != channels:
        sd, bd = fold_bn(params["gd"], params["bed"], params["md"], params["vd"])
        r = conv(x, params["wd"], stride, 1, 0) * sd + bd
    else:
        r = x
    return jnp.transpose(jax.nn.relu(y2 + r), (0, 3, 1, 2))


# ------------------------------------ main ----------------------------------- #
def make_params(key, in_channels, channels, with_downsample):
    ks = jax.random.split(key, 16)
    p = {
        "w1": 0.2 * jax.random.normal(ks[0], (channels, in_channels, 3, 3)),
        "g1": 1.0 + 0.1 * jax.random.normal(ks[1], (channels,)),
        "be1": 0.1 * jax.random.normal(ks[2], (channels,)),
        "m1": 0.1 * jax.random.normal(ks[3], (channels,)),
        "v1": jax.random.uniform(ks[4], (channels,), minval=0.5, maxval=1.5),
        "w2": 0.2 * jax.random.normal(ks[5], (channels, channels, 3, 3)),
        "g2": 1.0 + 0.1 * jax.random.normal(ks[6], (channels,)),
        "be2": 0.1 * jax.random.normal(ks[7], (channels,)),
        "m2": 0.1 * jax.random.normal(ks[8], (channels,)),
        "v2": jax.random.uniform(ks[9], (channels,), minval=0.5, maxval=1.5),
    }
    if with_downsample:
        p.update({
            "wd": 0.2 * jax.random.normal(ks[10], (channels, in_channels, 1, 1)),
            "gd": 1.0 + 0.1 * jax.random.normal(ks[11], (channels,)),
            "bed": 0.1 * jax.random.normal(ks[12], (channels,)),
            "md": 0.1 * jax.random.normal(ks[13], (channels,)),
            "vd": jax.random.uniform(ks[14], (channels,), minval=0.5, maxval=1.5),
        })
    return {k: v.astype(jnp.float32) for k, v in p.items()}


if __name__ == "__main__":
    root = jax.random.PRNGKey(0)
    kpa, kpb, kxa, kxb = jax.random.split(root, 4)

    # Config A: stride-2 block with 1x1 downsample (4 -> 8 channels).
    params_a = make_params(kpa, 4, 8, with_downsample=True)
    xa = jax.random.normal(kxa, (2, 4, 16, 16), dtype=jnp.float32)
    out_a = jax.block_until_ready(basic_block_forward(xa, params_a, stride=2, dilation=1))
    ref_a = jax.block_until_ready(reference_forward(xa, params_a, stride=2, dilation=1))
    np.testing.assert_allclose(np.asarray(out_a), np.asarray(ref_a), rtol=5e-3, atol=5e-3)

    # Config B: stride-1, dilation-2 block with identity residual (8 -> 8 channels).
    params_b = make_params(kpb, 8, 8, with_downsample=False)
    xb = jax.random.normal(kxb, (2, 8, 16, 16), dtype=jnp.float32)
    out_b = jax.block_until_ready(basic_block_forward(xb, params_b, stride=1, dilation=2))
    ref_b = jax.block_until_ready(reference_forward(xb, params_b, stride=1, dilation=2))
    np.testing.assert_allclose(np.asarray(out_b), np.asarray(ref_b), rtol=5e-3, atol=5e-3)

    print("KERNEL_OK")
</pallas_src>

<mosaic_0001>
module attributes {stable_mosaic.version = 11 : i64} {
  func.func @_conv_bn_act_kernel(%arg0: i32, %arg1: i32, %arg2: memref<6x72x4xbf16, #tpu.memory_space<vmem>>, %arg3: memref<9x4x128xbf16, #tpu.memory_space<vmem>>, %arg4: memref<1x128xf32, #tpu.memory_space<vmem>>, %arg5: memref<1x128xf32, #tpu.memory_space<vmem>>, %arg6: memref<1x64x128xf32, #tpu.memory_space<vmem>>) attributes {dimension_semantics = [#tpu.dimension_semantics<parallel>, #tpu.dimension_semantics<parallel>], iteration_bounds = array<i64: 2, 1>, scalar_prefetch = 0 : i64, scratch_operands = 0 : i64, tpu.core_type = #tpu.core_type<tc>, window_params = [{transform_indices = @transform_0, window_bounds = array<i64: 6, 72, 4>}, {transform_indices = @transform_1, window_bounds = array<i64: 9, 4, 128>}, {transform_indices = @transform_2, window_bounds = array<i64: 1, 128>}, {transform_indices = @transform_3, window_bounds = array<i64: 1, 128>}, {transform_indices = @transform_4, window_bounds = array<i64: 1, 64, 128>}]} {
    %c0 = arith.constant 0 : index
    %c0_0 = arith.constant 0 : index
    %c0_1 = arith.constant 0 : index
    %0 = vector.load %arg2[%c0, %c0_0, %c0_1] : memref<6x72x4xbf16, #tpu.memory_space<vmem>>, vector<1x64x4xbf16>
    %1 = vector.shape_cast %0 : vector<1x64x4xbf16> to vector<64x4xbf16>
    %c0_2 = arith.constant 0 : index
    %c0_3 = arith.constant 0 : index
    %c0_4 = arith.constant 0 : index
    %2 = vector.load %arg3[%c0_2, %c0_3, %c0_4] : memref<9x4x128xbf16, #tpu.memory_space<vmem>>, vector<1x4x128xbf16>
    %3 = vector.shape_cast %2 : vector<1x4x128xbf16> to vector<4x128xbf16>
    %cst = arith.constant dense<0.000000e+00> : vector<64x128xf32>
    %4 = tpu.matmul %1, %3, %cst {dimension_numbers = #tpu.dot_dimension_numbers<[1], [0], [0], [1], [0, 0, 1, 1], [], []>} : vector<64x4xbf16>, vector<4x128xbf16>, vector<64x128xf32> -> vector<64x128xf32>
    %c1 = arith.constant 1 : index
    %c0_5 = arith.constant 0 : index
    %c0_6 = arith.constant 0 : index
    %5 = vector.load %arg2[%c1, %c0_5, %c0_6] : memref<6x72x4xbf16, #tpu.memory_space<vmem>>, vector<1x64x4xbf16>
    %6 = vector.shape_cast %5 : vector<1x64x4xbf16> to vector<64x4xbf16>
    %c1_7 = arith.constant 1 : index
    %c0_8 = arith.constant 0 : index
    %c0_9 = arith.constant 0 : index
    %7 = vector.load %arg3[%c1_7, %c0_8, %c0_9] : memref<9x4x128xbf16, #tpu.memory_space<vmem>>, vector<1x4x128xbf16>
    %8 = vector.shape_cast %7 : vector<1x4x128xbf16> to vector<4x128xbf16>
    %cst_10 = arith.constant dense<0.000000e+00> : vector<64x128xf32>
    %9 = tpu.matmul %6, %8, %cst_10 {dimension_numbers = #tpu.dot_dimension_numbers<[1], [0], [0], [1], [0, 0, 1, 1], [], []>} : vector<64x4xbf16>, vector<4x128xbf16>, vector<64x128xf32> -> vector<64x128xf32>
    %10 = arith.addf %4, %9 : vector<64x128xf32>
    %c2 = arith.constant 2 : index
    %c0_11 = arith.constant 0 : index
    %c0_12 = arith.constant 0 : index
    %11 = vector.load %arg2[%c2, %c0_11, %c0_12] : memref<6x72x4xbf16, #tpu.memory_space<vmem>>, vector<1x64x4xbf16>
    %12 = vector.shape_cast %11 : vector<1x64x4xbf16> to vector<64x4xbf16>
    %c2_13 = arith.constant 2 : index
    %c0_14 = arith.constant 0 : index
    %c0_15 = arith.constant 0 : index
    %13 = vector.load %arg3[%c2_13, %c0_14, %c0_15] : memref<9x4x128xbf16, #tpu.memory_space<vmem>>, vector<1x4x128xbf16>
    %14 = vector.shape_cast %13 : vector<1x4x128xbf16> to vector<4x128xbf16>
    %cst_16 = arith.constant dense<0.000000e+00> : vector<64x128xf32>
    %15 = tpu.matmul %12, %14, %cst_16 {dimension_numbers = #tpu.dot_dimension_numbers<[1], [0], [0], [1], [0, 0, 1, 1], [], []>} : vector<64x4xbf16>, vector<4x128xbf16>, vector<64x128xf32> -> vector<64x128xf32>
    %16 = arith.addf %10, %15 : vector<64x128xf32>
    %c3 = arith.constant 3 : index
    %c0_17 = arith.constant 0 : index
    %c0_18 = arith.constant 0 : index
    %17 = vector.load %arg2[%c3, %c0_17, %c0_18] : memref<6x72x4xbf16, #tpu.memory_space<vmem>>, vector<1x64x4xbf16>
    %18 = vector.shape_cast %17 : vector<1x64x4xbf16> to vector<64x4xbf16>
    %c3_19 = arith.constant 3 : index
    %c0_20 = arith.constant 0 : index
    %c0_21 = arith.constant 0 : index
    %19 = vector.load %arg3[%c3_19, %c0_20, %c0_21] : memref<9x4x128xbf16, #tpu.memory_space<vmem>>, vector<1x4x128xbf16>
    %20 = vector.shape_cast %19 : vector<1x4x128xbf16> to vector<4x128xbf16>
    %cst_22 = arith.constant dense<0.000000e+00> : vector<64x128xf32>
    %21 = tpu.matmul %18, %20, %cst_22 {dimension_numbers = #tpu.dot_dimension_numbers<[1], [0], [0], [1], [0, 0, 1, 1], [], []>} : vector<64x4xbf16>, vector<4x128xbf16>, vector<64x128xf32> -> vector<64x128xf32>
    %22 = arith.addf %16, %21 : vector<64x128xf32>
    %c4 = arith.constant 4 : index
    %c0_23 = arith.constant 0 : index
    %c0_24 = arith.constant 0 : index
    %23 = vector.load %arg2[%c4, %c0_23, %c0_24] : memref<6x72x4xbf16, #tpu.memory_space<vmem>>, vector<1x64x4xbf16>
    %24 = vector.shape_cast %23 : vector<1x64x4xbf16> to vector<64x4xbf16>
    %c4_25 = arith.constant 4 : index
    %c0_26 = arith.constant 0 : index
    %c0_27 = arith.constant 0 : index
    %25 = vector.load %arg3[%c4_25, %c0_26, %c0_27] : memref<9x4x128xbf16, #tpu.memory_space<vmem>>, vector<1x4x128xbf16>
    %26 = vector.shape_cast %25 : vector<1x4x128xbf16> to vector<4x128xbf16>
    %cst_28 = arith.constant dense<0.000000e+00> : vector<64x128xf32>
    %27 = tpu.matmul %24, %26, %cst_28 {dimension_numbers = #tpu.dot_dimension_numbers<[1], [0], [0], [1], [0, 0, 1, 1], [], []>} : vector<64x4xbf16>, vector<4x128xbf16>, vector<64x128xf32> -> vector<64x128xf32>
    %28 = arith.addf %22, %27 : vector<64x128xf32>
    %c5 = arith.constant 5 : index
    %c0_29 = arith.constant 0 : index
    %c0_30 = arith.constant 0 : index
    %29 = vector.load %arg2[%c5, %c0_29, %c0_30] : memref<6x72x4xbf16, #tpu.memory_space<vmem>>, vector<1x64x4xbf16>
    %30 = vector.shape_cast %29 : vector<1x64x4xbf16> to vector<64x4xbf16>
    %c5_31 = arith.constant 5 : index
    %c0_32 = arith.constant 0 : index
    %c0_33 = arith.constant 0 : index
    %31 = vector.load %arg3[%c5_31, %c0_32, %c0_33] : memref<9x4x128xbf16, #tpu.memory_space<vmem>>, vector<1x4x128xbf16>
    %32 = vector.shape_cast %31 : vector<1x4x128xbf16> to vector<4x128xbf16>
    %cst_34 = arith.constant dense<0.000000e+00> : vector<64x128xf32>
    %33 = tpu.matmul %30, %32, %cst_34 {dimension_numbers = #tpu.dot_dimension_numbers<[1], [0], [0], [1], [0, 0, 1, 1], [], []>} : vector<64x4xbf16>, vector<4x128xbf16>, vector<64x128xf32> -> vector<64x128xf32>
    %34 = arith.addf %28, %33 : vector<64x128xf32>
    %c0_35 = arith.constant 0 : index
    %c8 = arith.constant 8 : index
    %c0_36 = arith.constant 0 : index
    %35 = vector.load %arg2[%c0_35, %c8, %c0_36] : memref<6x72x4xbf16, #tpu.memory_space<vmem>>, vector<1x64x4xbf16>
    %36 = vector.shape_cast %35 : vector<1x64x4xbf16> to vector<64x4xbf16>
    %c6 = arith.constant 6 : index
    %c0_37 = arith.constant 0 : index
    %c0_38 = arith.constant 0 : index
    %37 = vector.load %arg3[%c6, %c0_37, %c0_38] : memref<9x4x128xbf16, #tpu.memory_space<vmem>>, vector<1x4x128xbf16>
    %38 = vector.shape_cast %37 : vector<1x4x128xbf16> to vector<4x128xbf16>
    %cst_39 = arith.constant dense<0.000000e+00> : vector<64x128xf32>
    %39 = tpu.matmul %36, %38, %cst_39 {dimension_numbers = #tpu.dot_dimension_numbers<[1], [0], [0], [1], [0, 0, 1, 1], [], []>} : vector<64x4xbf16>, vector<4x128xbf16>, vector<64x128xf32> -> vector<64x128xf32>
    %40 = arith.addf %34, %39 : vector<64x128xf32>
    %c1_40 = arith.constant 1 : index
    %c8_41 = arith.constant 8 : index
    %c0_42 = arith.constant 0 : index
    %41 = vector.load %arg2[%c1_40, %c8_41, %c0_42] : memref<6x72x4xbf16, #tpu.memory_space<vmem>>, vector<1x64x4xbf16>
    %42 = vector.shape_cast %41 : vector<1x64x4xbf16> to vector<64x4xbf16>
    %c7 = arith.constant 7 : index
    %c0_43 = arith.constant 0 : index
    %c0_44 = arith.constant 0 : index
    %43 = vector.load %arg3[%c7, %c0_43, %c0_44] : memref<9x4x128xbf16, #tpu.memory_space<vmem>>, vector<1x4x128xbf16>
    %44 = vector.shape_cast %43 : vector<1x4x128xbf16> to vector<4x128xbf16>
    %cst_45 = arith.constant dense<0.000000e+00> : vector<64x128xf32>
    %45 = tpu.matmul %42, %44, %cst_45 {dimension_numbers = #tpu.dot_dimension_numbers<[1], [0], [0], [1], [0, 0, 1, 1], [], []>} : vector<64x4xbf16>, vector<4x128xbf16>, vector<64x128xf32> -> vector<64x128xf32>
    %46 = arith.addf %40, %45 : vector<64x128xf32>
    %c2_46 = arith.constant 2 : index
    %c8_47 = arith.constant 8 : index
    %c0_48 = arith.constant 0 : index
    %47 = vector.load %arg2[%c2_46, %c8_47, %c0_48] : memref<6x72x4xbf16, #tpu.memory_space<vmem>>, vector<1x64x4xbf16>
    %48 = vector.shape_cast %47 : vector<1x64x4xbf16> to vector<64x4xbf16>
    %c8_49 = arith.constant 8 : index
    %c0_50 = arith.constant 0 : index
    %c0_51 = arith.constant 0 : index
    %49 = vector.load %arg3[%c8_49, %c0_50, %c0_51] : memref<9x4x128xbf16, #tpu.memory_space<vmem>>, vector<1x4x128xbf16>
    %50 = vector.shape_cast %49 : vector<1x4x128xbf16> to vector<4x128xbf16>
    %cst_52 = arith.constant dense<0.000000e+00> : vector<64x128xf32>
    %51 = tpu.matmul %48, %50, %cst_52 {dimension_numbers = #tpu.dot_dimension_numbers<[1], [0], [0], [1], [0, 0, 1, 1], [], []>} : vector<64x4xbf16>, vector<4x128xbf16>, vector<64x128xf32> -> vector<64x128xf32>
    %52 = arith.addf %46, %51 : vector<64x128xf32>
    %c0_53 = arith.constant 0 : index
    %c0_54 = arith.constant 0 : index
    %53 = vector.load %arg4[%c0_53, %c0_54] : memref<1x128xf32, #tpu.memory_space<vmem>>, vector<1x128xf32>
    %54 = vector.broadcast %53 : vector<1x128xf32> to vector<64x128xf32>
    %55 = arith.mulf %52, %54 : vector<64x128xf32>
    %c0_55 = arith.constant 0 : index
    %c0_56 = arith.constant 0 : index
    %56 = vector.load %arg5[%c0_55, %c0_56] : memref<1x128xf32, #tpu.memory_space<vmem>>, vector<1x128xf32>
    %57 = vector.broadcast %56 : vector<1x128xf32> to vector<64x128xf32>
    %58 = arith.addf %55, %57 : vector<64x128xf32>
    %cst_57 = arith.constant 0.000000e+00 : f32
    %59 = vector.broadcast %cst_57 : f32 to vector<64x128xf32>
    %60 = arith.maximumf %58, %59 : vector<64x128xf32>
    %c0_58 = arith.constant 0 : index
    %c0_59 = arith.constant 0 : index
    %c0_60 = arith.constant 0 : index
    %61 = vector.load %arg6[%c0_58, %c0_59, %c0_60] : memref<1x64x128xf32, #tpu.memory_space<vmem>>, vector<1x64x128xf32>
    %62 = vector.shape_cast %61 : vector<1x64x128xf32> to vector<64x128xf32>
    %63 = vector.shape_cast %60 : vector<64x128xf32> to vector<1x64x128xf32>
    tpu.vector_store %arg6[%c0_58, %c0_59, %c0_60], %63 {strides = array<i32>} : memref<1x64x128xf32, #tpu.memory_space<vmem>>, vector<1x64x128xf32>,
    return
  }
  func.func @transform_0(%arg0: i32, %arg1: i32) -> (i32, i32, i32) {
    %c0_i32 = arith.constant 0 : i32
    %c0_i32_0 = arith.constant 0 : i32
    %c0_i32_1 = arith.constant 0 : i32
    return %arg0, %c0_i32, %c0_i32_0 : i32, i32, i32
  }
  func.func @transform_1(%arg0: i32, %arg1: i32) -> (i32, i32, i32) {
    %c0_i32 = arith.constant 0 : i32
    %c0_i32_0 = arith.constant 0 : i32
    %c0_i32_1 = arith.constant 0 : i32
    return %c0_i32, %c0_i32_0, %arg1 : i32, i32, i32
  }
  func.func @transform_2(%arg0: i32, %arg1: i32) -> (i32, i32) {
    %c0_i32 = arith.constant 0 : i32
    %c0_i32_0 = arith.constant 0 : i32
    return %c0_i32, %arg1 : i32, i32
  }
  func.func @transform_3(%arg0: i32, %arg1: i32) -> (i32, i32) {
    %c0_i32 = arith.constant 0 : i32
    %c0_i32_0 = arith.constant 0 : i32
    return %c0_i32, %arg1 : i32, i32
  }
  func.func @transform_4(%arg0: i32, %arg1: i32) -> (i32, i32, i32) {
    %c0_i32 = arith.constant 0 : i32
    %c0_i32_0 = arith.constant 0 : i32
    return %arg0, %c0_i32, %arg1 : i32, i32, i32
  }
}

</mosaic_0001>

<llo_original>
// kernel: tpu_custom_call.1
$region0: #{tpu_custom_call.1}
  #allocation0 [shape = 'u32[]', space=smem, size = 0x4, offset = 0x4, fixed_abs, tag = 'smem constant byte address 0x4 - core index']
  #allocation1 [shape = 'u32[144,128]{1,0:T(1,128)}', space=vmem, size = 0x12000, scoped, tag = 'internal scratch']
  %s0 = inlined_call_operand.vmem [shape: bf16[12,72,4], index: 0, kind: input, shape index: {}]
  %s1 = inlined_call_operand.vmem [shape: bf16[9,4,128], index: 1, kind: input, shape index: {}]
  %s2 = inlined_call_operand.vmem [shape: f32[1,128], index: 2, kind: input, shape index: {}]
  %s3 = inlined_call_operand.vmem [shape: f32[1,128], index: 3, kind: input, shape index: {}]
  %s4 = inlined_call_operand.hbm [shape: f32[2,64,128], index: 4, kind: output, shape index: {}]
  %s5 = sld [smem:[#allocation0]]
  $region49: #{tpu_custom_call.1} parent=0
    _
  %s7 = ssub.s32 1, %s5
  %s8 = scalar_select 0, %s7, %s5
  $region1: #{tpu_custom_call.1} parent=0
    #allocation2 [shape = 'u8[65536]{0}', space=vmem, size = 0x10000, scoped, tag = 'output window, operand 0']
    #allocation3 [shape = 's32[2]{0}', space=sflag, size = 0x8, scoped, tag = 'scoped memory for tpu_custom_call.1']
    %9 = vsyncpa [#allocation3], 0
    %s10 = scalar_lea.sflag [#allocation3], 1
    %11 = vsyncpa %s10, 0
    loop: start=0, step=1, limit=4
    $region2: #{tpu_custom_call.1} parent=1 // loop_pre_header
      _
    $region3: #{tpu_custom_call.1} parent=1 // loop_header
      %s13 = sphi 0, %s17
      %p14 = scmp.ge.s32.totalorder %s13, 4
      %s20 = sphi 0, %s32
      %s21 = sphi 0, %s28
      %s22 = sphi 0, %s20
      %s23 = sphi 0, %s21
      %s24 = sphi 0, %s22
      %s25 = sphi 0, %s23
      %s35 = sphi 0, %s37
      %s38 = sphi 0, %s35
      %s39 = sphi 0, %s38
      %s55 = sphi 0, %s39
      %s61 = sphi 0, %s63
      %s64 = sphi 0, %s61
      %s65 = sphi 0, %s64
      %s81 = sphi 0, %s65
      %s87 = sphi 0, %s89
      %s90 = sphi 0, %s87
      %s91 = sphi 0, %s90
      %s107 = sphi 0, %s91
      %s113 = sphi 0, %s115
      %s116 = sphi 0, %s113
      %s117 = sphi 0, %s116
      %s133 = sphi 0, %s117
      %s141 = sphi 0, %s143
      %s144 = sphi 0, %s141
      %s145 = sphi 0, %s144
      %s161 = sphi 0, %s145
    $region4: #{tpu_custom_call.1} parent=1 // loop_header_branch
      %16 = sbr.rel (%p14) target = $region8
    $region5: #{tpu_custom_call.1} parent=1 // loop_body
      %s18 = ssub.s32 %s13, 1
      %s19 = ssub.s32 %s13, 2
      %s26 = sadd.s32 1, %s21
      %p27 = scmp.ge.s32.totalorder %s26, 1
      %s28 = scalar_select %p27, 0, %s26
      %s29 = sadd.s32 1, %s20
      %s30 = scalar_select %p27, %s29, %s20
      %p31 = scmp.ge.s32.totalorder %s30, 2
      %s32 = scalar_select %p31, 0, %s30
      %s33 = ssub.s32 %s20, %s32
      %p34 = scmp.eq.s32.totalorder %s33, 0
      %s36 = sadd.s32 %s35, 1
      %s37 = scalar_select %p34, %s35, %s36
      %p40 = pneg %p34
      %p41 = scmp.eq.s32.totalorder %s13, 1
      %p42 = por %p40, %p41
      %p43 = scmp.ne.s32.totalorder %s35, %s38
      %p44 = scmp.eq.s32.totalorder %s13, 0
      %p45 = por %p43, %p44
      %p46 = scmp.ne.s32.totalorder %s35, %s38
      %p47 = scmp.eq.s32.totalorder %s18, 1
      %p48 = por %p46, %p47
      %p49 = scmp.ne.s32.totalorder %s38, %s39
      %p50 = scmp.eq.s32.totalorder %s18, 0
      %p51 = por %p49, %p50
      %p52 = scmp.ne.s32.totalorder %s38, %s39
      %p53 = scmp.eq.s32.totalorder %s19, 1
      %p54 = por %p52, %p53
      %p56 = scmp.ne.s32.totalorder %s39, %s55
      %p57 = scmp.eq.s32.totalorder %s19, 0
      %p58 = por %p56, %p57
      %s59 = ssub.s32 %s21, %s28
      %p60 = scmp.eq.s32.totalorder %s59, 0
      %s62 = sadd.s32 %s61, 1
      %s63 = scalar_select %p60, %s61, %s62
      %p66 = pneg %p60
      %p67 = scmp.eq.s32.totalorder %s13, 1
      %p68 = por %p66, %p67
      %p69 = scmp.ne.s32.totalorder %s61, %s64
      %p70 = scmp.eq.s32.totalorder %s13, 0
      %p71 = por %p69, %p70
      %p72 = scmp.ne.s32.totalorder %s61, %s64
      %p73 = scmp.eq.s32.totalorder %s18, 1
      %p74 = por %p72, %p73
      %p75 = scmp.ne.s32.totalorder %s64, %s65
      %p76 = scmp.eq.s32.totalorder %s18, 0
      %p77 = por %p75, %p76
      %p78 = scmp.ne.s32.totalorder %s64, %s65
      %p79 = scmp.eq.s32.totalorder %s19, 1
      %p80 = por %p78, %p79
      %p82 = scmp.ne.s32.totalorder %s65, %s81
      %p83 = scmp.eq.s32.totalorder %s19, 0
      %p84 = por %p82, %p83
      %s85 = ssub.s32 %s21, %s28
      %p86 = scmp.eq.s32.totalorder %s85, 0
      %s88 = sadd.s32 %s87, 1
      %s89 = scalar_select %p86, %s87, %s88
      %p92 = pneg %p86
      %p93 = scmp.eq.s32.totalorder %s13, 1
      %p94 = por %p92, %p93
      %p95 = scmp.ne.s32.totalorder %s87, %s90
      %p96 = scmp.eq.s32.totalorder %s13, 0
      %p97 = por %p95, %p96
      %p98 = scmp.ne.s32.totalorder %s87, %s90
      %p99 = scmp.eq.s32.totalorder %s18, 1
      %p100 = por %p98, %p99
      %p101 = scmp.ne.s32.totalorder %s90, %s91
      %p102 = scmp.eq.s32.totalorder %s18, 0
      %p103 = por %p101, %p102
      %p104 = scmp.ne.s32.totalorder %s90, %s91
      %p105 = scmp.eq.s32.totalorder %s19, 1
      %p106 = por %p104, %p105
      %p108 = scmp.ne.s32.totalorder %s91, %s107
      %p109 = scmp.eq.s32.totalorder %s19, 0
      %p110 = por %p108, %p109
      %s111 = ssub.s32 %s21, %s28
      %p112 = scmp.eq.s32.totalorder %s111, 0
      %s114 = sadd.s32 %s113, 1
      %s115 = scalar_select %p112, %s113, %s114
      %p118 = pneg %p112
      %p119 = scmp.eq.s32.totalorder %s13, 1
      %p120 = por %p118, %p119
      %p121 = scmp.ne.s32.totalorder %s113, %s116
      %p122 = scmp.eq.s32.totalorder %s13, 0
      %p123 = por %p121, %p122
      %p124 = scmp.ne.s32.totalorder %s113, %s116
      %p125 = scmp.eq.s32.totalorder %s18, 1
      %p126 = por %p124, %p125
      %p127 = scmp.ne.s32.totalorder %s116, %s117
      %p128 = scmp.eq.s32.totalorder %s18, 0
      %p129 = por %p127, %p128
      %p130 = scmp.ne.s32.totalorder %s116, %s117
      %p131 = scmp.eq.s32.totalorder %s19, 1
      %p132 = por %p130, %p131
      %p134 = scmp.ne.s32.totalorder %s117, %s133
      %p135 = scmp.eq.s32.totalorder %s19, 0
      %p136 = por %p134, %p135
      %s137 = ssub.s32 %s20, %s32
      %s138 = ssub.s32 %s21, %s28
      %s139 = sor.u32 %s137, %s138
      %p140 = scmp.eq.s32.totalorder %s139, 0
      %s142 = sadd.s32 %s141, 1
      %s143 = scalar_select %p140, %s141, %s142
      %p146 = pneg %p140
      %p147 = scmp.eq.s32.totalorder %s13, 1
      %p148 = por %p146, %p147
      %p149 = scmp.ne.s32.totalorder %s141, %s144
      %p150 = scmp.eq.s32.totalorder %s13, 0
      %p151 = por %p149, %p150
      %p152 = scmp.ne.s32.totalorder %s141, %s144
      %p153 = scmp.eq.s32.totalorder %s18, 1
      %p154 = por %p152, %p153
      %p155 = scmp.ne.s32.totalorder %s144, %s145
      %p156 = scmp.eq.s32.totalorder %s18, 0
      %p157 = por %p155, %p156
      %p158 = scmp.ne.s32.totalorder %s144, %s145
      %p159 = scmp.eq.s32.totalorder %s19, 1
      %p160 = por %p158, %p159
      %p162 = scmp.ne.s32.totalorder %s145, %s161
      %p163 = scmp.eq.s32.totalorder %s19, 0
      %p164 = por %p162, %p163
      %p165 = scmp.le.s32.totalorder 1, %s13
      %p166 = scmp.lt.s32.totalorder %s13, 3
      %p167 = pnand %p165, %p166
      %p168 = pneg %p167
      // Predicated region
      $region9: #{tpu_custom_call.1} parent=5 // pred_check
        _
      $region10: #{tpu_custom_call.1} parent=5 // pred_check_branch
        %170 = sbr.rel (%p167) target = $region12
      $region11: #{tpu_custom_call.1} parent=5 // pred_region
        %s171 = ssub.s32 %s13, 1
        // Predicated region
        $region13: #{tpu_custom_call.1} parent=11 // pred_check
          %p172 = pneg %p77
        $region14: #{tpu_custom_call.1} parent=11 // pred_check_branch
          %174 = sbr.rel (%p172) target = $region16
        $region15: #{tpu_custom_call.1} parent=11 // pred_region
          %p175 = scmp.lt.s32.totalorder %s23, 0
          %s176 = scalar_select %p175, %s23, 0
          %s177 = smul.addr %s176, 2
          %s178 = scalar_lea.vmem %s1, %s177
        $region16: #{tpu_custom_call.1} parent=11 // pred_fallthru
          _
        // Predicated region
        $region17: #{tpu_custom_call.1} parent=11 // pred_check
          %p179 = pneg %p103
        $region18: #{tpu_custom_call.1} parent=11 // pred_check_branch
          %181 = sbr.rel (%p179) target = $region20
        $region19: #{tpu_custom_call.1} parent=11 // pred_region
          %p182 = scmp.lt.s32.totalorder %s23, 0
          %s183 = scalar_select %p182, %s23, 0
          %s184 = scalar_lea.vmem %s2, %s183
        $region20: #{tpu_custom_call.1} parent=11 // pred_fallthru
          _
        // Predicated region
        $region21: #{tpu_custom_call.1} parent=11 // pred_check
          %p185 = pneg %p129
        $region22: #{tpu_custom_call.1} parent=11 // pred_check_branch
          %187 = sbr.rel (%p185) target = $region24
        $region23: #{tpu_custom_call.1} parent=11 // pred_region
          %p188 = scmp.lt.s32.totalorder %s23, 0
          %s189 = scalar_select %p188, %s23, 0
          %s190 = scalar_lea.vmem %s3, %s189
        $region24: #{tpu_custom_call.1} parent=11 // pred_fallthru
          _
      $region12: #{tpu_custom_call.1} parent=5 // pred_fallthru
        _
      %p191 = scmp.lt.s32.totalorder %s13, 2
      // Predicated region
      $region25: #{tpu_custom_call.1} parent=5 // pred_check
        %p192 = pneg %p191
      $region26: #{tpu_custom_call.1} parent=5 // pred_check_branch
        %194 = sbr.rel (%p192) target = $region28
      $region27: #{tpu_custom_call.1} parent=5 // pred_region
        // Predicated region
        $region29: #{tpu_custom_call.1} parent=27 // pred_check
          %p195 = pneg %p45
        $region30: #{tpu_custom_call.1} parent=27 // pred_check_branch
          %197 = sbr.rel (%p195) target = $region32
        $region31: #{tpu_custom_call.1} parent=27 // pred_region
          %s198 = smul.u32 6, %s20
          %p199 = scmp.lt.s32.totalorder %s198, 11
          %s200 = scalar_select %p199, %s198, 11
          %s201 = smul.addr %s200, 9
          %s202 = smul.addr %s201, 4
          %s203 = scalar_lea.vmem %s0, %s202
          %s204 = smul.u32 6, %s20
        $region32: #{tpu_custom_call.1} parent=27 // pred_fallthru
          _
      $region28: #{tpu_custom_call.1} parent=5 // pred_fallthru
        _
      %p205 = scmp.le.s32.totalorder 1, %s13
      %p206 = scmp.lt.s32.totalorder %s13, 3
      %p207 = pnand %p205, %p206
      %p208 = pneg %p207
      // Predicated region
      $region33: #{tpu_custom_call.1} parent=5 // pred_check
        _
      $region34: #{tpu_custom_call.1} parent=5 // pred_check_branch
        %210 = sbr.rel (%p207) target = $region36
      $region35: #{tpu_custom_call.1} parent=5 // pred_region
        %s211 = ssub.s32 %s13, 1
        %s212 = smul.u32 6, %s22
        %p213 = scmp.lt.s32.totalorder %s212, 11
        %s214 = scalar_select %p213, %s212, 11
        %s215 = smul.addr %s214, 9
        %s216 = smul.addr %s215, 4
        %s217 = scalar_lea.vmem %s0, %s216
        %p218 = pneg %p51
        %p219 = pneg %p48
        %p220 = scmp.lt.s32.totalorder %s23, 0
        %s221 = scalar_select %p220, %s23, 0
        %s222 = smul.addr %s221, 2
        %s223 = scalar_lea.vmem %s1, %s222
        %p224 = pneg %p77
        %p225 = pneg %p74
        %p226 = scmp.lt.s32.totalorder %s23, 0
        %s227 = scalar_select %p226, %s23, 0
        %s228 = scalar_lea.vmem %s2, %s227
        %p229 = pneg %p103
        %p230 = pneg %p100
        %p231 = scmp.lt.s32.totalorder %s23, 0
        %s232 = scalar_select %p231, %s23, 0
        %s233 = scalar_lea.vmem %s3, %s232
        %p234 = pneg %p129
        %p235 = pneg %p126
        %p236 = pneg %p157
        %p237 = pneg %p154
        %s238 = sand.u32 %s144, 1
        %s239 = scalar_lea.sflag [#allocation3], %s238
        %s240 = sand.u32 %s144, 1
        %s241 = smul.addr %s240, 64
        %s242 = scalar_lea.vmem [#allocation2], %s241
        %s243 = smul.u32 6, %s22
        %p244 = scmp.lt.s32.totalorder %s243, 11
        %s245 = scalar_select %p244, %s243, 11
        %s246 = smul.addr %s245, 9
        %s247 = smul.addr %s246, 4
        %s248 = scalar_lea.vmem %s0, %s247
        %s249 = smul.u32 6, %s22
        %p250 = scmp.lt.s32.totalorder %s23, 0
        %s251 = scalar_select %p250, %s23, 0
        %s252 = smul.addr %s251, 2
        %s253 = scalar_lea.vmem %s1, %s252
        %p254 = scmp.lt.s32.totalorder %s23, 0
        %s255 = scalar_select %p254, %s23, 0
        %s256 = scalar_lea.vmem %s2, %s255
        %p257 = scmp.lt.s32.totalorder %s23, 0
        %s258 = scalar_select %p257, %s23, 0
        %s259 = scalar_lea.vmem %s3, %s258
        %v261 = vld [vmem:[%s248] sm:$0xf]
        %v262 = vld [vmem:[%s248 + $0x4] sm:$0xf]
        %v263 = vld [vmem:[%s248 + $0x8] sm:$0xf]
        %v264 = vld [vmem:[%s248 + $0xc] sm:$0xf]
        %v265 = vld [vmem:[%s248 + $0x10] sm:$0xf]
        %v266 = vld [vmem:[%s248 + $0x14] sm:$0xf]
        %v267 = vld [vmem:[%s248 + $0x18] sm:$0xf]
        %v268 = vld [vmem:[%s248 + $0x1c] sm:$0xf]
        %v269 = vld [vmem:[%s253] sm:$0x3]
        %s270 = scalar_lea.vmem %s248, 36
        %v271 = vld [vmem:[%s270] sm:$0xf]
        %v272 = vld [vmem:[%s270 + $0x4] sm:$0xf]
        %v273 = vld [vmem:[%s270 + $0x8] sm:$0xf]
        %v274 = vld [vmem:[%s270 + $0xc] sm:$0xf]
        %v275 = vld [vmem:[%s270 + $0x10] sm:$0xf]
        %v276 = vld [vmem:[%s270 + $0x14] sm:$0xf]
        %v277 = vld [vmem:[%s270 + $0x18] sm:$0xf]
        %v278 = vld [vmem:[%s270 + $0x1c] sm:$0xf]
        %s279 = scalar_lea.vmem %s253, 2
        %v280 = vld [vmem:[%s279] sm:$0x3]
        %v289 = vunpack.c.l.b16 %v271
        %v290 = vunpack.c.l.b16 %v272
        %v291 = vunpack.c.l.b16 %v273
        %v292 = vunpack.c.l.b16 %v274
        %v293 = vunpack.c.l.b16 %v275
        %v294 = vunpack.c.l.b16 %v276
        %v295 = vunpack.c.l.b16 %v277
        %v296 = vunpack.c.l.b16 %v278
        %v297 = vpack.c.b16 %v290, %v289
        %v298 = vpack.c.b16 %v292, %v291
        %v299 = vpack.c.b16 %v294, %v293
        %v300 = vpack.c.b16 %v296, %v295
        %vm301 = vcmask 31744
        %v303 = vsel %vm301, %v297, 0
        %v306 = vsel %vm301, %v298, 0
        %v309 = vsel %vm301, %v299, 0
        %v312 = vsel %vm301, %v300, 0
        %vm314 = vcmask 1041408
        %v316 = vsel %vm314, %v280, 0
        %318 = vmatprep.subr.bf16.mxu0 0
        %319 = vmatpush1.bf16.msra.mxu0 %v316
        %320 = vmatprep.subr.bf16.mxu0 0
        %321 = vmatpush1.bf16.msra.mxu0 0
        %322 = vmatprep.subr.bf16.mxu0 0
        %323 = vmatpush1.bf16.msra.mxu0 0
        %324 = vmatprep.subr.bf16.mxu0 0
        %325 = vmatpush1.bf16.msra.mxu0 0
        %326 = vmatprep.subr.bf16.mxu0 0
        %327 = vmatpush1.bf16.msra.mxu0 0
        %328 = vmatprep.subr.bf16.mxu0 0
        %329 = vmatpush1.bf16.msra.mxu0 0
        %330 = vmatprep.subr.bf16.mxu0 0
        %331 = vmatpush1.bf16.msra.mxu0 0
        %332 = vmatprep.subr.bf16.mxu0 0
        %333 = vmatpush1.bf16.msra.mxu0 0
        %334 = vmatprep.subr.bf16.mxu0 0
        %335 = vmatpush1.bf16.msra.mxu0 0
        %336 = vmatprep.subr.bf16.mxu0 0
        %337 = vmatpush1.bf16.msra.mxu0 0
        %338 = vmatprep.subr.bf16.mxu0 0
        %339 = vmatpush1.bf16.msra.mxu0 0
        %340 = vmatprep.subr.bf16.mxu0 0
        %341 = vmatpush1.bf16.msra.mxu0 0
        %342 = vmatprep.subr.bf16.mxu0 0
        %343 = vmatpush1.bf16.msra.mxu0 0
        %344 = vmatprep.subr.bf16.mxu0 0
        %345 = vmatpush1.bf16.msra.mxu0 0
        %346 = vmatprep.subr.bf16.mxu0 0
        %347 = vmatpush1.bf16.msra.mxu0 0
        %348 = vmatprep.subr.bf16.mxu0 0
        %349 = vmatpush1.bf16.msra.mxu0 0
        %350 = vmatprep.mubr.bf16.mxu0 0
        %351 = vmatmul.mubr.bf16.gmra.mrb[0].mxu0 %v303
        %v352 = vpop.f32.mrb[0].mxu0
        %v353 = vadd.f32 0.0, %v352
        %v354 = vpop.f32.mrb[0].mxu0
        %v355 = vpop.f32.mrb[0].mxu0
        %v356 = vadd.f32 0.0, %v355
        %v357 = vpop.f32.mrb[0].mxu0
        %358 = vmatprep.mubr.bf16.mxu0 0
        %359 = vmatmul.mubr.bf16.gmra.mrb[0].mxu0 %v306
        %v360 = vpop.f32.mrb[0].mxu0
        %v361 = vadd.f32 0.0, %v360
        %v362 = vpop.f32.mrb[0].mxu0
        %v363 = vpop.f32.mrb[0].mxu0
        %v364 = vadd.f32 0.0, %v363
        %v365 = vpop.f32.mrb[0].mxu0
        %366 = vmatprep.mubr.bf16.mxu0 0
        %367 = vmatmul.mubr.bf16.gmra.mrb[0].mxu0 %v309
        %v368 = vpop.f32.mrb[0].mxu0
        %v369 = vadd.f32 0.0, %v368
        %v370 = vpop.f32.mrb[0].mxu0
        %v371 = vpop.f32.mrb[0].mxu0
        %v372 = vadd.f32 0.0, %v371
        %v373 = vpop.f32.mrb[0].mxu0
        %374 = vmatprep.mubr.bf16.mxu0 0
        %375 = vmatmul.mubr.bf16.gmra.mrb[0].mxu0 %v312
        %v376 = vpop.f32.mrb[0].mxu0
        %v377 = vadd.f32 0.0, %v376
        %v378 = vpop.f32.mrb[0].mxu0
        %v379 = vpop.f32.mrb[0].mxu0
        %v380 = vadd.f32 0.0, %v379
        %v381 = vpop.f32.mrb[0].mxu0
        %382 = vdwg.mxu0
        %v391 = vunpack.c.l.b16 %v261
        %v392 = vunpack.c.l.b16 %v262
        %v393 = vunpack.c.l.b16 %v263
        %v394 = vunpack.c.l.b16 %v264
        %v395 = vunpack.c.l.b16 %v265
        %v396 = vunpack.c.l.b16 %v266
        %v397 = vunpack.c.l.b16 %v267
        %v398 = vunpack.c.l.b16 %v268
        %v399 = vpack.c.b16 %v392, %v391
        %v400 = vpack.c.b16 %v394, %v393
        %v401 = vpack.c.b16 %v396, %v395
        %v402 = vpack.c.b16 %v398, %v397
        %v404 = vsel %vm301, %v399, 0
        %v407 = vsel %vm301, %v400, 0
        %v410 = vsel %vm301, %v401, 0
        %v413 = vsel %vm301, %v402, 0
        %v416 = vsel %vm314, %v269, 0
        %418 = vmatprep.subr.bf16.mxu0 0
        %419 = vmatpush1.bf16.msra.mxu0 %v416
        %420 = vmatprep.subr.bf16.mxu0 0
        %421 = vmatpush1.bf16.msra.mxu0 0
        %422 = vmatprep.subr.bf16.mxu0 0
        %423 = vmatpush1.bf16.msra.mxu0 0
        %424 = vmatprep.subr.bf16.mxu0 0
        %425 = vmatpush1.bf16.msra.mxu0 0
        %426 = vmatprep.subr.bf16.mxu0 0
        %427 = vmatpush1.bf16.msra.mxu0 0
        %428 = vmatprep.subr.bf16.mxu0 0
        %429 = vmatpush1.bf16.msra.mxu0 0
        %430 = vmatprep.subr.bf16.mxu0 0
        %431 = vmatpush1.bf16.msra.mxu0 0
        %432 = vmatprep.subr.bf16.mxu0 0
        %433 = vmatpush1.bf16.msra.mxu0 0
        %434 = vmatprep.subr.bf16.mxu0 0
        %435 = vmatpush1.bf16.msra.mxu0 0
        %436 = vmatprep.subr.bf16.mxu0 0
        %437 = vmatpush1.bf16.msra.mxu0 0
        %438 = vmatprep.subr.bf16.mxu0 0
        %439 = vmatpush1.bf16.msra.mxu0 0
        %440 = vmatprep.subr.bf16.mxu0 0
        %441 = vmatpush1.bf16.msra.mxu0 0
        %442 = vmatprep.subr.bf16.mxu0 0
        %443 = vmatpush1.bf16.msra.mxu0 0
        %444 = vmatprep.subr.bf16.mxu0 0
        %445 = vmatpush1.bf16.msra.mxu0 0
        %446 = vmatprep.subr.bf16.mxu0 0
        %447 = vmatpush1.bf16.msra.mxu0 0
        %448 = vmatprep.subr.bf16.mxu0 0
        %449 = vmatpush1.bf16.msra.mxu0 0
        %450 = vmatprep.mubr.bf16.mxu0 0
        %451 = vmatmul.mubr.bf16.gmra.mrb[0].mxu0 %v404
        %v452 = vpop.f32.mrb[0].mxu0
        %v453 = vadd.f32 %v353, %v452
        %v454 = vpop.f32.mrb[0].mxu0
        %v455 = vpop.f32.mrb[0].mxu0
        %v456 = vadd.f32 %v356, %v455
        %v457 = vpop.f32.mrb[0].mxu0
        %458 = vmatprep.mubr.bf16.mxu0 0
        %459 = vmatmul.mubr.bf16.gmra.mrb[0].mxu0 %v407
        %v460 = vpop.f32.mrb[0].mxu0
        %v461 = vadd.f32 %v361, %v460
        %v462 = vpop.f32.mrb[0].mxu0
        %v463 = vpop.f32.mrb[0].mxu0
        %v464 = vadd.f32 %v364, %v463
        %v465 = vpop.f32.mrb[0].mxu0
        %466 = vmatprep.mubr.bf16.mxu0 0
        %467 = vmatmul.mubr.bf16.gmra.mrb[0].mxu0 %v410
        %v468 = vpop.f32.mrb[0].mxu0
        %v469 = vadd.f32 %v369, %v468
        %v470 = vpop.f32.mrb[0].mxu0
        %v471 = vpop.f32.mrb[0].mxu0
        %v472 = vadd.f32 %v372, %v471
        %v473 = vpop.f32.mrb[0].mxu0
        %474 = vmatprep.mubr.bf16.mxu0 0
        %475 = vmatmul.mubr.bf16.gmra.mrb[0].mxu0 %v413
        %v476 = vpop.f32.mrb[0].mxu0
        %v477 = vadd.f32 %v377, %v476
        %v478 = vpop.f32.mrb[0].mxu0
        %v479 = vpop.f32.mrb[0].mxu0
        %v480 = vadd.f32 %v380, %v479
        %v481 = vpop.f32.mrb[0].mxu0
        %482 = vdwg.mxu0
        %s483 = scalar_lea.vmem %s248, 72
        %v484 = vld [vmem:[%s483] sm:$0xf]
        %v485 = vld [vmem:[%s483 + $0x4] sm:$0xf]
        %v486 = vld [vmem:[%s483 + $0x8] sm:$0xf]
        %v487 = vld [vmem:[%s483 + $0xc] sm:$0xf]
        %v488 = vld [vmem:[%s483 + $0x10] sm:$0xf]
        %v489 = vld [vmem:[%s483 + $0x14] sm:$0xf]
        %v490 = vld [vmem:[%s483 + $0x18] sm:$0xf]
        %v491 = vld [vmem:[%s483 + $0x1c] sm:$0xf]
        %s492 = scalar_lea.vmem %s253, 4
        %v493 = vld [vmem:[%s492] sm:$0x3]
        %v502 = vunpack.c.l.b16 %v484
        %v503 = vunpack.c.l.b16 %v485
        %v504 = vunpack.c.l.b16 %v486
        %v505 = vunpack.c.l.b16 %v487
        %v506 = vunpack.c.l.b16 %v488
        %v507 = vunpack.c.l.b16 %v489
        %v508 = vunpack.c.l.b16 %v490
        %v509 = vunpack.c.l.b16 %v491
        %v510 = vpack.c.b16 %v503, %v502
        %v511 = vpack.c.b16 %v505, %v504
        %v512 = vpack.c.b16 %v507, %v506
        %v513 = vpack.c.b16 %v509, %v508
        %v515 = vsel %vm301, %v510, 0
        %v518 = vsel %vm301, %v511, 0
        %v521 = vsel %vm301, %v512, 0
        %v524 = vsel %vm301, %v513, 0
        %v527 = vsel %vm314, %v493, 0
        %529 = vmatprep.subr.bf16.mxu0 0
        %530 = vmatpush1.bf16.msra.mxu0 %v527
        %531 = vmatprep.subr.bf16.mxu0 0
        %532 = vmatpush1.bf16.msra.mxu0 0
        %533 = vmatprep.subr.bf16.mxu0 0
        %534 = vmatpush1.bf16.msra.mxu0 0
        %535 = vmatprep.subr.bf16.mxu0 0
        %536 = vmatpush1.bf16.msra.mxu0 0
        %537 = vmatprep.subr.bf16.mxu0 0
        %538 = vmatpush1.bf16.msra.mxu0 0
        %539 = vmatprep.subr.bf16.mxu0 0
        %540 = vmatpush1.bf16.msra.mxu0 0
        %541 = vmatprep.subr.bf16.mxu0 0
        %542 = vmatpush1.bf16.msra.mxu0 0
        %543 = vmatprep.subr.bf16.mxu0 0
        %544 = vmatpush1.bf16.msra.mxu0 0
        %545 = vmatprep.subr.bf16.mxu0 0
        %546 = vmatpush1.bf16.msra.mxu0 0
        %547 = vmatprep.subr.bf16.mxu0 0
        %548 = vmatpush1.bf16.msra.mxu0 0
        %549 = vmatprep.subr.bf16.mxu0 0
        %550 = vmatpush1.bf16.msra.mxu0 0
        %551 = vmatprep.subr.bf16.mxu0 0
        %552 = vmatpush1.bf16.msra.mxu0 0
        %553 = vmatprep.subr.bf16.mxu0 0
        %554 = vmatpush1.bf16.msra.mxu0 0
        %555 = vmatprep.subr.bf16.mxu0 0
        %556 = vmatpush1.bf16.msra.mxu0 0
        %557 = vmatprep.subr.bf16.mxu0 0
        %558 = vmatpush1.bf16.msra.mxu0 0
        %559 = vmatprep.subr.bf16.mxu0 0
        %560 = vmatpush1.bf16.msra.mxu0 0
        %561 = vmatprep.mubr.bf16.mxu0 0
        %562 = vmatmul.mubr.bf16.gmra.mrb[0].mxu0 %v515
        %v563 = vpop.f32.mrb[0].mxu0
        %v564 = vadd.f32 0.0, %v563
        %v565 = vpop.f32.mrb[0].mxu0
        %v566 = vpop.f32.mrb[0].mxu0
        %v567 = vadd.f32 0.0, %v566
        %v568 = vpop.f32.mrb[0].mxu0
        %569 = vmatprep.mubr.bf16.mxu0 0
        %570 = vmatmul.mubr.bf16.gmra.mrb[0].mxu0 %v518
        %v571 = vpop.f32.mrb[0].mxu0
        %v572 = vadd.f32 0.0, %v571
        %v573 = vpop.f32.mrb[0].mxu0
        %v574 = vpop.f32.mrb[0].mxu0
        %v575 = vadd.f32 0.0, %v574
        %v576 = vpop.f32.mrb[0].mxu0
        %577 = vmatprep.mubr.bf16.mxu0 0
        %578 = vmatmul.mubr.bf16.gmra.mrb[0].mxu0 %v521
        %v579 = vpop.f32.mrb[0].mxu0
        %v580 = vadd.f32 0.0, %v579
        %v581 = vpop.f32.mrb[0].mxu0
        %v582 = vpop.f32.mrb[0].mxu0
        %v583 = vadd.f32 0.0, %v582
        %v584 = vpop.f32.mrb[0].mxu0
        %585 = vmatprep.mubr.bf16.mxu0 0
        %586 = vmatmul.mubr.bf16.gmra.mrb[0].mxu0 %v524
        %v587 = vpop.f32.mrb[0].mxu0
        %v588 = vadd.f32 0.0, %v587
        %v589 = vpop.f32.mrb[0].mxu0
        %v590 = vpop.f32.mrb[0].mxu0
        %v591 = vadd.f32 0.0, %v590
        %v592 = vpop.f32.mrb[0].mxu0
        %593 = vdwg.mxu0
        %v594 = vadd.f32 %v453, %v564
        %v595 = vadd.f32 %v456, %v567
        %v596 = vadd.f32 %v461, %v572
        %v597 = vadd.f32 %v464, %v575
        %v598 = vadd.f32 %v469, %v580
        %v599 = vadd.f32 %v472, %v583
        %v600 = vadd.f32 %v477, %v588
        %v601 = vadd.f32 %v480, %v591
        %s602 = scalar_lea.vmem %s248, 108
        %v603 = vld [vmem:[%s602] sm:$0xf]
        %v604 = vld [vmem:[%s602 + $0x4] sm:$0xf]
        %v605 = vld [vmem:[%s602 + $0x8] sm:$0xf]
        %v606 = vld [vmem:[%s602 + $0xc] sm:$0xf]
        %v607 = vld [vmem:[%s602 + $0x10] sm:$0xf]
        %v608 = vld [vmem:[%s602 + $0x14] sm:$0xf]
        %v609 = vld [vmem:[%s602 + $0x18] sm:$0xf]
        %v610 = vld [vmem:[%s602 + $0x1c] sm:$0xf]
        %s611 = scalar_lea.vmem %s253, 6
        %v612 = vld [vmem:[%s611] sm:$0x3]
        %v621 = vunpack.c.l.b16 %v603
        %v622 = vunpack.c.l.b16 %v604
        %v623 = vunpack.c.l.b16 %v605
        %v624 = vunpack.c.l.b16 %v606
        %v625 = vunpack.c.l.b16 %v607
        %v626 = vunpack.c.l.b16 %v608
        %v627 = vunpack.c.l.b16 %v609
        %v628 = vunpack.c.l.b16 %v610
        %v629 = vpack.c.b16 %v622, %v621
        %v630 = vpack.c.b16 %v624, %v623
        %v631 = vpack.c.b16 %v626, %v625
        %v632 = vpack.c.b16 %v628, %v627
        %v634 = vsel %vm301, %v629, 0
        %v637 = vsel %vm301, %v630, 0
        %v640 = vsel %vm301, %v631, 0
        %v643 = vsel %vm301, %v632, 0
        %v646 = vsel %vm314, %v612, 0
        %648 = vmatprep.subr.bf16.mxu0 0
        %649 = vmatpush1.bf16.msra.mxu0 %v646
        %650 = vmatprep.subr.bf16.mxu0 0
        %651 = vmatpush1.bf16.msra.mxu0 0
        %652 = vmatprep.subr.bf16.mxu0 0
        %653 = vmatpush1.bf16.msra.mxu0 0
        %654 = vmatprep.subr.bf16.mxu0 0
        %655 = vmatpush1.bf16.msra.mxu0 0
        %656 = vmatprep.subr.bf16.mxu0 0
        %657 = vmatpush1.bf16.msra.mxu0 0
        %658 = vmatprep.subr.bf16.mxu0 0
        %659 = vmatpush1.bf16.msra.mxu0 0
        %660 = vmatprep.subr.bf16.mxu0 0
        %661 = vmatpush1.bf16.msra.mxu0 0
        %662 = vmatprep.subr.bf16.mxu0 0
        %663 = vmatpush1.bf16.msra.mxu0 0
        %664 = vmatprep.subr.bf16.mxu0 0
        %665 = vmatpush1.bf16.msra.mxu0 0
        %666 = vmatprep.subr.bf16.mxu0 0
        %667 = vmatpush1.bf16.msra.mxu0 0
        %668 = vmatprep.subr.bf16.mxu0 0
        %669 = vmatpush1.bf16.msra.mxu0 0
        %670 = vmatprep.subr.bf16.mxu0 0
        %671 = vmatpush1.bf16.msra.mxu0 0
        %672 = vmatprep.subr.bf16.mxu0 0
        %673 = vmatpush1.bf16.msra.mxu0 0
        %674 = vmatprep.subr.bf16.mxu0 0
        %675 = vmatpush1.bf16.msra.mxu0 0
        %676 = vmatprep.subr.bf16.mxu0 0
        %677 = vmatpush1.bf16.msra.mxu0 0
        %678 = vmatprep.subr.bf16.mxu0 0
        %679 = vmatpush1.bf16.msra.mxu0 0
        %680 = vmatprep.mubr.bf16.mxu0 0
        %681 = vmatmul.mubr.bf16.gmra.mrb[0].mxu0 %v634
        %v682 = vpop.f32.mrb[0].mxu0
        %v683 = vadd.f32 0.0, %v682
        %v684 = vpop.f32.mrb[0].mxu0
        %v685 = vpop.f32.mrb[0].mxu0
        %v686 = vadd.f32 0.0, %v685
        %v687 = vpop.f32.mrb[0].mxu0
        %688 = vmatprep.mubr.bf16.mxu0 0
        %689 = vmatmul.mubr.bf16.gmra.mrb[0].mxu0 %v637
        %v690 = vpop.f32.mrb[0].mxu0
        %v691 = vadd.f32 0.0, %v690
        %v692 = vpop.f32.mrb[0].mxu0
        %v693 = vpop.f32.mrb[0].mxu0
        %v694 = vadd.f32 0.0, %v693
        %v695 = vpop.f32.mrb[0].mxu0
        %696 = vmatprep.mubr.bf16.mxu0 0
        %697 = vmatmul.mubr.bf16.gmra.mrb[0].mxu0 %v640
        %v698 = vpop.f32.mrb[0].mxu0
        %v699 = vadd.f32 0.0, %v698
        %v700 = vpop.f32.mrb[0].mxu0
        %v701 = vpop.f32.mrb[0].mxu0
        %v702 = vadd.f32 0.0, %v701
        %v703 = vpop.f32.mrb[0].mxu0
        %704 = vmatprep.mubr.bf16.mxu0 0
        %705 = vmatmul.mubr.bf16.gmra.mrb[0].mxu0 %v643
        %v706 = vpop.f32.mrb[0].mxu0
        %v707 = vadd.f32 0.0, %v706
        %v708 = vpop.f32.mrb[0].mxu0
        %v709 = vpop.f32.mrb[0].mxu0
        %v710 = vadd.f32 0.0, %v709
        %v711 = vpop.f32.mrb[0].mxu0
        %712 = vdwg.mxu0
        %v713 = vadd.f32 %v594, %v683
        %v714 = vadd.f32 %v595, %v686
        %v715 = vadd.f32 %v596, %v691
        %v716 = vadd.f32 %v597, %v694
        %v717 = vadd.f32 %v598, %v699
        %v718 = vadd.f32 %v599, %v702
        %v719 = vadd.f32 %v600, %v707
        %v720 = vadd.f32 %v601, %v710
        %s721 = scalar_lea.vmem %s248, 144
        %v722 = vld [vmem:[%s721] sm:$0xf]
        %v723 = vld [vmem:[%s721 + $0x4] sm:$0xf]
        %v724 = vld [vmem:[%s721 + $0x8] sm:$0xf]
        %v725 = vld [vmem:[%s721 + $0xc] sm:$0xf]
        %v726 = vld [vmem:[%s721 + $0x10] sm:$0xf]
        %v727 = vld [vmem:[%s721 + $0x14] sm:$0xf]
        %v728 = vld [vmem:[%s721 + $0x18] sm:$0xf]
        %v729 = vld [vmem:[%s721 + $0x1c] sm:$0xf]
        %s730 = scalar_lea.vmem %s253, 8
        %v731 = vld [vmem:[%s730] sm:$0x3]
        %v740 = vunpack.c.l.b16 %v722
        %v741 = vunpack.c.l.b16 %v723
        %v742 = vunpack.c.l.b16 %v724
        %v743 = vunpack.c.l.b16 %v725
        %v744 = vunpack.c.l.b16 %v726
        %v745 = vunpack.c.l.b16 %v727
        %v746 = vunpack.c.l.b16 %v728
        %v747 = vunpack.c.l.b16 %v729
        %v748 = vpack.c.b16 %v741, %v740
        %v749 = vpack.c.b16 %v743, %v742
        %v750 = vpack.c.b16 %v745, %v744
        %v751 = vpack.c.b16 %v747, %v746
        %v753 = vsel %vm301, %v748, 0
        %v756 = vsel %vm301, %v749, 0
        %v759 = vsel %vm301, %v750, 0
        %v762 = vsel %vm301, %v751, 0
        %v765 = vsel %vm314, %v731, 0
        %767 = vmatprep.subr.bf16.mxu0 0
        %768 = vmatpush1.bf16.msra.mxu0 %v765
        %769 = vmatprep.subr.bf16.mxu0 0
        %770 = vmatpush1.bf16.msra.mxu0 0
        %771 = vmatprep.subr.bf16.mxu0 0
        %772 = vmatpush1.bf16.msra.mxu0 0
        %773 = vmatprep.subr.bf16.mxu0 0
        %774 = vmatpush1.bf16.msra.mxu0 0
        %775 = vmatprep.subr.bf16.mxu0 0
        %776 = vmatpush1.bf16.msra.mxu0 0
        %777 = vmatprep.subr.bf16.mxu0 0
        %778 = vmatpush1.bf16.msra.mxu0 0
        %779 = vmatprep.subr.bf16.mxu0 0
        %780 = vmatpush1.bf16.msra.mxu0 0
        %781 = vmatprep.subr.bf16.mxu0 0
        %782 = vmatpush1.bf16.msra.mxu0 0
        %783 = vmatprep.subr.bf16.mxu0 0
        %784 = vmatpush1.bf16.msra.mxu0 0
        %785 = vmatprep.subr.bf16.mxu0 0
        %786 = vmatpush1.bf16.msra.mxu0 0
        %787 = vmatprep.subr.bf16.mxu0 0
        %788 = vmatpush1.bf16.msra.mxu0 0
        %789 = vmatprep.subr.bf16.mxu0 0
        %790 = vmatpush1.bf16.msra.mxu0 0
        %791 = vmatprep.subr.bf16.mxu0 0
        %792 = vmatpush1.bf16.msra.mxu0 0
        %793 = vmatprep.subr.bf16.mxu0 0
        %794 = vmatpush1.bf16.msra.mxu0 0
        %795 = vmatprep.subr.bf16.mxu0 0
        %796 = vmatpush1.bf16.msra.mxu0 0
        %797 = vmatprep.subr.bf16.mxu0 0
        %798 = vmatpush1.bf16.msra.mxu0 0
        %799 = vmatprep.mubr.bf16.mxu0 0
        %800 = vmatmul.mubr.bf16.gmra.mrb[0].mxu0 %v753
        %v801 = vpop.f32.mrb[0].mxu0
        %v802 = vadd.f32 0.0, %v801
        %v803 = vpop.f32.mrb[0].mxu0
        %v804 = vpop.f32.mrb[0].mxu0
        %v805 = vadd.f32 0.0, %v804
        %v806 = vpop.f32.mrb[0].mxu0
        %807 = vmatprep.mubr.bf16.mxu0 0
        %808 = vmatmul.mubr.bf16.gmra.mrb[0].mxu0 %v756
        %v809 = vpop.f32.mrb[0].mxu0
        %v810 = vadd.f32 0.0, %v809
        %v811 = vpop.f32.mrb[0].mxu0
        %v812 = vpop.f32.mrb[0].mxu0
        %v813 = vadd.f32 0.0, %v812
        %v814 = vpop.f32.mrb[0].mxu0
        %815 = vmatprep.mubr.bf16.mxu0 0
        %816 = vmatmul.mubr.bf16.gmra.mrb[0].mxu0 %v759
        %v817 = vpop.f32.mrb[0].mxu0
        %v818 = vadd.f32 0.0, %v817
        %v819 = vpop.f32.mrb[0].mxu0
        %v820 = vpop.f32.mrb[0].mxu0
        %v821 = vadd.f32 0.0, %v820
        %v822 = vpop.f32.mrb[0].mxu0
        %823 = vmatprep.mubr.bf16.mxu0 0
        %824 = vmatmul.mubr.bf16.gmra.mrb[0].mxu0 %v762
        %v825 = vpop.f32.mrb[0].mxu0
        %v826 = vadd.f32 0.0, %v825
        %v827 = vpop.f32.mrb[0].mxu0
        %v828 = vpop.f32.mrb[0].mxu0
        %v829 = vadd.f32 0.0, %v828
        %v830 = vpop.f32.mrb[0].mxu0
        %831 = vdwg.mxu0
        %v832 = vadd.f32 %v713, %v802
        %v833 = vadd.f32 %v714, %v805
        %v834 = vadd.f32 %v715, %v810
        %v835 = vadd.f32 %v716, %v813
        %v836 = vadd.f32 %v717, %v818
        %v837 = vadd.f32 %v718, %v821
        %v838 = vadd.f32 %v719, %v826
        %v839 = vadd.f32 %v720, %v829
        %s840 = scalar_lea.vmem %s248, 180
        %v841 = vld [vmem:[%s840] sm:$0xf]
        %v842 = vld [vmem:[%s840 + $0x4] sm:$0xf]
        %v843 = vld [vmem:[%s840 + $0x8] sm:$0xf]
        %v844 = vld [vmem:[%s840 + $0xc] sm:$0xf]
        %v845 = vld [vmem:[%s840 + $0x10] sm:$0xf]
        %v846 = vld [vmem:[%s840 + $0x14] sm:$0xf]
        %v847 = vld [vmem:[%s840 + $0x18] sm:$0xf]
        %v848 = vld [vmem:[%s840 + $0x1c] sm:$0xf]
        %s849 = scalar_lea.vmem %s253, 10
        %v850 = vld [vmem:[%s849] sm:$0x3]
        %v859 = vunpack.c.l.b16 %v841
        %v860 = vunpack.c.l.b16 %v842
        %v861 = vunpack.c.l.b16 %v843
        %v862 = vunpack.c.l.b16 %v844
        %v863 = vunpack.c.l.b16 %v845
        %v864 = vunpack.c.l.b16 %v846
        %v865 = vunpack.c.l.b16 %v847
        %v866 = vunpack.c.l.b16 %v848
        %v867 = vpack.c.b16 %v860, %v859
        %v868 = vpack.c.b16 %v862, %v861
        %v869 = vpack.c.b16 %v864, %v863
        %v870 = vpack.c.b16 %v866, %v865
        %v872 = vsel %vm301, %v867, 0
        %v875 = vsel %vm301, %v868, 0
        %v878 = vsel %vm301, %v869, 0
        %v881 = vsel %vm301, %v870, 0
        %v884 = vsel %vm314, %v850, 0
        %886 = vmatprep.subr.bf16.mxu0 0
        %887 = vmatpush1.bf16.msra.mxu0 %v884
        %888 = vmatprep.subr.bf16.mxu0 0
        %889 = vmatpush1.bf16.msra.mxu0 0
        %890 = vmatprep.subr.bf16.mxu0 0
        %891 = vmatpush1.bf16.msra.mxu0 0
        %892 = vmatprep.subr.bf16.mxu0 0
        %893 = vmatpush1.bf16.msra.mxu0 0
        %894 = vmatprep.subr.bf16.mxu0 0
        %895 = vmatpush1.bf16.msra.mxu0 0
        %896 = vmatprep.subr.bf16.mxu0 0
        %897 = vmatpush1.bf16.msra.mxu0 0
        %898 = vmatprep.subr.bf16.mxu0 0
        %899 = vmatpush1.bf16.msra.mxu0 0
        %900 = vmatprep.subr.bf16.mxu0 0
        %901 = vmatpush1.bf16.msra.mxu0 0
        %902 = vmatprep.subr.bf16.mxu0 0
        %903 = vmatpush1.bf16.msra.mxu0 0
        %904 = vmatprep.subr.bf16.mxu0 0
        %905 = vmatpush1.bf16.msra.mxu0 0
        %906 = vmatprep.subr.bf16.mxu0 0
        %907 = vmatpush1.bf16.msra.mxu0 0
        %908 = vmatprep.subr.bf16.mxu0 0
        %909 = vmatpush1.bf16.msra.mxu0 0
        %910 = vmatprep.subr.bf16.mxu0 0
        %911 = vmatpush1.bf16.msra.mxu0 0
        %912 = vmatprep.subr.bf16.mxu0 0
        %913 = vmatpush1.bf16.msra.mxu0 0
        %914 = vmatprep.subr.bf16.mxu0 0
        %915 = vmatpush1.bf16.msra.mxu0 0
        %916 = vmatprep.subr.bf16.mxu0 0
        %917 = vmatpush1.bf16.msra.mxu0 0
        %918 = vmatprep.mubr.bf16.mxu0 0
        %919 = vmatmul.mubr.bf16.gmra.mrb[0].mxu0 %v872
        %v920 = vpop.f32.mrb[0].mxu0
        %v921 = vadd.f32 0.0, %v920
        %v922 = vpop.f32.mrb[0].mxu0
        %v923 = vpop.f32.mrb[0].mxu0
        %v924 = vadd.f32 0.0, %v923
        %v925 = vpop.f32.mrb[0].mxu0
        %926 = vmatprep.mubr.bf16.mxu0 0
        %927 = vmatmul.mubr.bf16.gmra.mrb[0].mxu0 %v875
        %v928 = vpop.f32.mrb[0].mxu0
        %v929 = vadd.f32 0.0, %v928
        %v930 = vpop.f32.mrb[0].mxu0
        %v931 = vpop.f32.mrb[0].mxu0
        %v932 = vadd.f32 0.0, %v931
        %v933 = vpop.f32.mrb[0].mxu0
        %934 = vmatprep.mubr.bf16.mxu0 0
        %935 = vmatmul.mubr.bf16.gmra.mrb[0].mxu0 %v878
        %v936 = vpop.f32.mrb[0].mxu0
        %v937 = vadd.f32 0.0, %v936
        %v938 = vpop.f32.mrb[0].mxu0
        %v939 = vpop.f32.mrb[0].mxu0
        %v940 = vadd.f32 0.0, %v939
        %v941 = vpop.f32.mrb[0].mxu0
        %942 = vmatprep.mubr.bf16.mxu0 0
        %943 = vmatmul.mubr.bf16.gmra.mrb[0].mxu0 %v881
        %v944 = vpop.f32.mrb[0].mxu0
        %v945 = vadd.f32 0.0, %v944
        %v946 = vpop.f32.mrb[0].mxu0
        %v947 = vpop.f32.mrb[0].mxu0
        %v948 = vadd.f32 0.0, %v947
        %v949 = vpop.f32.mrb[0].mxu0
        %950 = vdwg.mxu0
        %v951 = vadd.f32 %v832, %v921
        %v952 = vadd.f32 %v833, %v924
        %v953 = vadd.f32 %v834, %v929
        %v954 = vadd.f32 %v835, %v932
        %v955 = vadd.f32 %v836, %v937
        %v956 = vadd.f32 %v837, %v940
        %v957 = vadd.f32 %v838, %v945
        %v958 = vadd.f32 %v839, %v948
        %v959 = vld [vmem:[%s248 + $0x4] sm:$0xf]
        %v960 = vld [vmem:[%s248 + $0x8] sm:$0xf]
        %v961 = vld [vmem:[%s248 + $0xc] sm:$0xf]
        %v962 = vld [vmem:[%s248 + $0x10] sm:$0xf]
        %v963 = vld [vmem:[%s248 + $0x14] sm:$0xf]
        %v964 = vld [vmem:[%s248 + $0x18] sm:$0xf]
        %v965 = vld [vmem:[%s248 + $0x1c] sm:$0xf]
        %v966 = vld [vmem:[%s248 + $0x20] sm:$0xf]
        %s967 = scalar_lea.vmem %s253, 12
        %v968 = vld [vmem:[%s967] sm:$0x3]
        %v977 = vunpack.c.l.b16 %v959
        %v978 = vunpack.c.l.b16 %v960
        %v979 = vunpack.c.l.b16 %v961
        %v980 = vunpack.c.l.b16 %v962
        %v981 = vunpack.c.l.b16 %v963
        %v982 = vunpack.c.l.b16 %v964
        %v983 = vunpack.c.l.b16 %v965
        %v984 = vunpack.c.l.b16 %v966
        %v985 = vpack.c.b16 %v978, %v977
        %v986 = vpack.c.b16 %v980, %v979
        %v987 = vpack.c.b16 %v982, %v981
        %v988 = vpack.c.b16 %v984, %v983
        %v990 = vsel %vm301, %v985, 0
        %v993 = vsel %vm301, %v986, 0
        %v996 = vsel %vm301, %v987, 0
        %v999 = vsel %vm301, %v988, 0
        %v1002 = vsel %vm314, %v968, 0
        %1004 = vmatprep.subr.bf16.mxu0 0
        %1005 = vmatpush1.bf16.msra.mxu0 %v1002
        %1006 = vmatprep.subr.bf16.mxu0 0
        %1007 = vmatpush1.bf16.msra.mxu0 0
        %1008 = vmatprep.subr.bf16.mxu0 0
        %1009 = vmatpush1.bf16.msra.mxu0 0
        %1010 = vmatprep.subr.bf16.mxu0 0
        %1011 = vmatpush1.bf16.msra.mxu0 0
        %1012 = vmatprep.subr.bf16.mxu0 0
        %1013 = vmatpush1.bf16.msra.mxu0 0
        %1014 = vmatprep.subr.bf16.mxu0 0
        %1015 = vmatpush1.bf16.msra.mxu0 0
        %1016 = vmatprep.subr.bf16.mxu0 0
        %1017 = vmatpush1.bf16.msra.mxu0 0
        %1018 = vmatprep.subr.bf16.mxu0 0
        %1019 = vmatpush1.bf16.msra.mxu0 0
        %1020 = vmatprep.subr.bf16.mxu0 0
        %1021 = vmatpush1.bf16.msra.mxu0 0
        %1022 = vmatprep.subr.bf16.mxu0 0
        %1023 = vmatpush1.bf16.msra.mxu0 0
        %1024 = vmatprep.subr.bf16.mxu0 0
        %1025 = vmatpush1.bf16.msra.mxu0 0
        %1026 = vmatprep.subr.bf16.mxu0 0
        %1027 = vmatpush1.bf16.msra.mxu0 0
        %1028 = vmatprep.subr.bf16.mxu0 0
        %1029 = vmatpush1.bf16.msra.mxu0 0
        %1030 = vmatprep.subr.bf16.mxu0 0
        %1031 = vmatpush1.bf16.msra.mxu0 0
        %1032 = vmatprep.subr.bf16.mxu0 0
        %1033 = vmatpush1.bf16.msra.mxu0 0
        %1034 = vmatprep.subr.bf16.mxu0 0
        %1035 = vmatpush1.bf16.msra.mxu0 0
        %1036 = vmatprep.mubr.bf16.mxu0 0
        %1037 = vmatmul.mubr.bf16.gmra.mrb[0].mxu0 %v990
        %v1038 = vpop.f32.mrb[0].mxu0
        %v1039 = vadd.f32 0.0, %v1038
        %v1040 = vpop.f32.mrb[0].mxu0
        %v1041 = vpop.f32.mrb[0].mxu0
        %v1042 = vadd.f32 0.0, %v1041
        %v1043 = vpop.f32.mrb[0].mxu0
        %1044 = vmatprep.mubr.bf16.mxu0 0
        %1045 = vmatmul.mubr.bf16.gmra.mrb[0].mxu0 %v993
        %v1046 = vpop.f32.mrb[0].mxu0
        %v1047 = vadd.f32 0.0, %v1046
        %v1048 = vpop.f32.mrb[0].mxu0
        %v1049 = vpop.f32.mrb[0].mxu0
        %v1050 = vadd.f32 0.0, %v1049
        %v1051 = vpop.f32.mrb[0].mxu0
        %1052 = vmatprep.mubr.bf16.mxu0 0
        %1053 = vmatmul.mubr.bf16.gmra.mrb[0].mxu0 %v996
        %v1054 = vpop.f32.mrb[0].mxu0
        %v1055 = vadd.f32 0.0, %v1054
        %v1056 = vpop.f32.mrb[0].mxu0
        %v1057 = vpop.f32.mrb[0].mxu0
        %v1058 = vadd.f32 0.0, %v1057
        %v1059 = vpop.f32.mrb[0].mxu0
        %1060 = vmatprep.mubr.bf16.mxu0 0
        %1061 = vmatmul.mubr.bf16.gmra.mrb[0].mxu0 %v999
        %v1062 = vpop.f32.mrb[0].mxu0
        %v1063 = vadd.f32 0.0, %v1062
        %v1064 = vpop.f32.mrb[0].mxu0
        %v1065 = vpop.f32.mrb[0].mxu0
        %v1066 = vadd.f32 0.0, %v1065
        %v1067 = vpop.f32.mrb[0].mxu0
        %1068 = vdwg.mxu0
        %v1069 = vadd.f32 %v951, %v1039
        %v1070 = vadd.f32 %v952, %v1042
        %v1071 = vadd.f32 %v953, %v1047
        %v1072 = vadd.f32 %v954, %v1050
        %v1073 = vadd.f32 %v955, %v1055
        %v1074 = vadd.f32 %v956, %v1058
        %v1075 = vadd.f32 %v957, %v1063
        %v1076 = vadd.f32 %v958, %v1066
        %v1077 = vld [vmem:[%s270 + $0x4] sm:$0xf]
        %v1078 = vld [vmem:[%s270 + $0x8] sm:$0xf]
        %v1079 = vld [vmem:[%s270 + $0xc] sm:$0xf]
        %v1080 = vld [vmem:[%s270 + $0x10] sm:$0xf]
        %v1081 = vld [vmem:[%s270 + $0x14] sm:$0xf]
        %v1082 = vld [vmem:[%s270 + $0x18] sm:$0xf]
        %v1083 = vld [vmem:[%s270 + $0x1c] sm:$0xf]
        %v1084 = vld [vmem:[%s270 + $0x20] sm:$0xf]
        %s1085 = scalar_lea.vmem %s253, 14
        %v1086 = vld [vmem:[%s1085] sm:$0x3]
        %v1095 = vunpack.c.l.b16 %v1077
        %v1096 = vunpack.c.l.b16 %v1078
        %v1097 = vunpack.c.l.b16 %v1079
        %v1098 = vunpack.c.l.b16 %v1080
        %v1099 = vunpack.c.l.b16 %v1081
        %v1100 = vunpack.c.l.b16 %v1082
        %v1101 = vunpack.c.l.b16 %v1083
        %v1102 = vunpack.c.l.b16 %v1084
        %v1103 = vpack.c.b16 %v1096, %v1095
        %v1104 = vpack.c.b16 %v1098, %v1097
        %v1105 = vpack.c.b16 %v1100, %v1099
        %v1106 = vpack.c.b16 %v1102, %v1101
        %v1108 = vsel %vm301, %v1103, 0
        %v1111 = vsel %vm301, %v1104, 0
        %v1114 = vsel %vm301, %v1105, 0
        %v1117 = vsel %vm301, %v1106, 0
        %v1120 = vsel %vm314, %v1086, 0
        %1122 = vmatprep.subr.bf16.mxu0 0
        %1123 = vmatpush1.bf16.msra.mxu0 %v1120
        %1124 = vmatprep.subr.bf16.mxu0 0
        %1125 = vmatpush1.bf16.msra.mxu0 0
        %1126 = vmatprep.subr.bf16.mxu0 0
        %1127 = vmatpush1.bf16.msra.mxu0 0
        %1128 = vmatprep.subr.bf16.mxu0 0
        %1129 = vmatpush1.bf16.msra.mxu0 0
        %1130 = vmatprep.subr.bf16.mxu0 0
        %1131 = vmatpush1.bf16.msra.mxu0 0
        %1132 = vmatprep.subr.bf16.mxu0 0
        %1133 = vmatpush1.bf16.msra.mxu0 0
        %1134 = vmatprep.subr.bf16.mxu0 0
        %1135 = vmatpush1.bf16.msra.mxu0 0
        %1136 = vmatprep.subr.bf16.mxu0 0
        %1137 = vmatpush1.bf16.msra.mxu0 0
        %1138 = vmatprep.subr.bf16.mxu0 0
        %1139 = vmatpush1.bf16.msra.mxu0 0
        %1140 = vmatprep.subr.bf16.mxu0 0
        %1141 = vmatpush1.bf16.msra.mxu0 0
        %1142 = vmatprep.subr.bf16.mxu0 0
        %1143 = vmatpush1.bf16.msra.mxu0 0
        %1144 = vmatprep.subr.bf16.mxu0 0
        %1145 = vmatpush1.bf16.msra.mxu0 0
        %1146 = vmatprep.subr.bf16.mxu0 0
        %1147 = vmatpush1.bf16.msra.mxu0 0
        %1148 = vmatprep.subr.bf16.mxu0 0
        %1149 = vmatpush1.bf16.msra.mxu0 0
        %1150 = vmatprep.subr.bf16.mxu0 0
        %1151 = vmatpush1.bf16.msra.mxu0 0
        %1152 = vmatprep.subr.bf16.mxu0 0
        %1153 = vmatpush1.bf16.msra.mxu0 0
        %1154 = vmatprep.mubr.bf16.mxu0 0
        %1155 = vmatmul.mubr.bf16.gmra.mrb[0].mxu0 %v1108
        %v1156 = vpop.f32.mrb[0].mxu0
        %v1157 = vadd.f32 0.0, %v1156
        %v1158 = vpop.f32.mrb[0].mxu0
        %v1159 = vpop.f32.mrb[0].mxu0
        %v1160 = vadd.f32 0.0, %v1159
        %v1161 = vpop.f32.mrb[0].mxu0
        %1162 = vmatprep.mubr.bf16.mxu0 0
        %1163 = vmatmul.mubr.bf16.gmra.mrb[0].mxu0 %v1111
        %v1164 = vpop.f32.mrb[0].mxu0
        %v1165 = vadd.f32 0.0, %v1164
        %v1166 = vpop.f32.mrb[0].mxu0
        %v1167 = vpop.f32.mrb[0].mxu0
        %v1168 = vadd.f32 0.0, %v1167
        %v1169 = vpop.f32.mrb[0].mxu0
        %1170 = vmatprep.mubr.bf16.mxu0 0
        %1171 = vmatmul.mubr.bf16.gmra.mrb[0].mxu0 %v1114
        %v1172 = vpop.f32.mrb[0].mxu0
        %v1173 = vadd.f32 0.0, %v1172
        %v1174 = vpop.f32.mrb[0].mxu0
        %v1175 = vpop.f32.mrb[0].mxu0
        %v1176 = vadd.f32 0.0, %v1175
        %v1177 = vpop.f32.mrb[0].mxu0
        %1178 = vmatprep.mubr.bf16.mxu0 0
        %1179 = vmatmul.mubr.bf16.gmra.mrb[0].mxu0 %v1117
        %v1180 = vpop.f32.mrb[0].mxu0
        %v1181 = vadd.f32 0.0, %v1180
        %v1182 = vpop.f32.mrb[0].mxu0
        %v1183 = vpop.f32.mrb[0].mxu0
        %v1184 = vadd.f32 0.0, %v1183
        %v1185 = vpop.f32.mrb[0].mxu0
        %1186 = vdwg.mxu0
        %v1187 = vadd.f32 %v1069, %v1157
        %v1188 = vadd.f32 %v1070, %v1160
        %v1189 = vadd.f32 %v1071, %v1165
        %v1190 = vadd.f32 %v1072, %v1168
        %v1191 = vadd.f32 %v1073, %v1173
        %v1192 = vadd.f32 %v1074, %v1176
        %v1193 = vadd.f32 %v1075, %v1181
        %v1194 = vadd.f32 %v1076, %v1184
        %v1195 = vld [vmem:[%s483 + $0x4] sm:$0xf]
        %v1196 = vld [vmem:[%s483 + $0x8] sm:$0xf]
        %v1197 = vld [vmem:[%s483 + $0xc] sm:$0xf]
        %v1198 = vld [vmem:[%s483 + $0x10] sm:$0xf]
        %v1199 = vld [vmem:[%s483 + $0x14] sm:$0xf]
        %v1200 = vld [vmem:[%s483 + $0x18] sm:$0xf]
        %v1201 = vld [vmem:[%s483 + $0x1c] sm:$0xf]
        %v1202 = vld [vmem:[%s483 + $0x20] sm:$0xf]
        %s1203 = scalar_lea.vmem %s253, 16
        %v1204 = vld [vmem:[%s1203] sm:$0x3]
        %v1213 = vunpack.c.l.b16 %v1195
        %v1214 = vunpack.c.l.b16 %v1196
        %v1215 = vunpack.c.l.b16 %v1197
        %v1216 = vunpack.c.l.b16 %v1198
        %v1217 = vunpack.c.l.b16 %v1199
        %v1218 = vunpack.c.l.b16 %v1200
        %v1219 = vunpack.c.l.b16 %v1201
        %v1220 = vunpack.c.l.b16 %v1202
        %v1221 = vpack.c.b16 %v1214, %v1213
        %v1222 = vpack.c.b16 %v1216, %v1215
        %v1223 = vpack.c.b16 %v1218, %v1217
        %v1224 = vpack.c.b16 %v1220, %v1219
        %v1226 = vsel %vm301, %v1221, 0
        %v1229 = vsel %vm301, %v1222, 0
        %v1232 = vsel %vm301, %v1223, 0
        %v1235 = vsel %vm301, %v1224, 0
        %v1238 = vsel %vm314, %v1204, 0
        %1240 = vmatprep.subr.bf16.mxu0 0
        %1241 = vmatpush1.bf16.msra.mxu0 %v1238
        %1242 = vmatprep.subr.bf16.mxu0 0
        %1243 = vmatpush1.bf16.msra.mxu0 0
        %1244 = vmatprep.subr.bf16.mxu0 0
        %1245 = vmatpush1.bf16.msra.mxu0 0
        %1246 = vmatprep.subr.bf16.mxu0 0
        %1247 = vmatpush1.bf16.msra.mxu0 0
        %1248 = vmatprep.subr.bf16.mxu0 0
        %1249 = vmatpush1.bf16.msra.mxu0 0
        %1250 = vmatprep.subr.bf16.mxu0 0
        %1251 = vmatpush1.bf16.msra.mxu0 0
        %1252 = vmatprep.subr.bf16.mxu0 0
        %1253 = vmatpush1.bf16.msra.mxu0 0
        %1254 = vmatprep.subr.bf16.mxu0 0
        %1255 = vmatpush1.bf16.msra.mxu0 0
        %1256 = vmatprep.subr.bf16.mxu0 0
        %1257 = vmatpush1.bf16.msra.mxu0 0
        %1258 = vmatprep.subr.bf16.mxu0 0
        %1259 = vmatpush1.bf16.msra.mxu0 0
        %1260 = vmatprep.subr.bf16.mxu0 0
        %1261 = vmatpush1.bf16.msra.mxu0 0
        %1262 = vmatprep.subr.bf16.mxu0 0
        %1263 = vmatpush1.bf16.msra.mxu0 0
        %1264 = vmatprep.subr.bf16.mxu0 0
        %1265 = vmatpush1.bf16.msra.mxu0 0
        %1266 = vmatprep.subr.bf16.mxu0 0
        %1267 = vmatpush1.bf16.msra.mxu0 0
        %1268 = vmatprep.subr.bf16.mxu0 0
        %1269 = vmatpush1.bf16.msra.mxu0 0
        %1270 = vmatprep.subr.bf16.mxu0 0
        %1271 = vmatpush1.bf16.msra.mxu0 0
        %1272 = vmatprep.mubr.bf16.mxu0 0
        %1273 = vmatmul.mubr.bf16.gmra.mrb[0].mxu0 %v1226
        %v1274 = vpop.f32.mrb[0].mxu0
        %v1275 = vadd.f32 0.0, %v1274
        %v1276 = vpop.f32.mrb[0].mxu0
        %v1277 = vpop.f32.mrb[0].mxu0
        %v1278 = vadd.f32 0.0, %v1277
        %v1279 = vpop.f32.mrb[0].mxu0
        %1280 = vmatprep.mubr.bf16.mxu0 0
        %1281 = vmatmul.mubr.bf16.gmra.mrb[0].mxu0 %v1229
        %v1282 = vpop.f32.mrb[0].mxu0
        %v1283 = vadd.f32 0.0, %v1282
        %v1284 = vpop.f32.mrb[0].mxu0
        %v1285 = vpop.f32.mrb[0].mxu0
        %v1286 = vadd.f32 0.0, %v1285
        %v1287 = vpop.f32.mrb[0].mxu0
        %1288 = vmatprep.mubr.bf16.mxu0 0
        %1289 = vmatmul.mubr.bf16.gmra.mrb[0].mxu0 %v1232
        %v1290 = vpop.f32.mrb[0].mxu0
        %v1291 = vadd.f32 0.0, %v1290
        %v1292 = vpop.f32.mrb[0].mxu0
        %v1293 = vpop.f32.mrb[0].mxu0
        %v1294 = vadd.f32 0.0, %v1293
        %v1295 = vpop.f32.mrb[0].mxu0
        %1296 = vmatprep.mubr.bf16.mxu0 0
        %1297 = vmatmul.mubr.bf16.gmra.mrb[0].mxu0 %v1235
        %v1298 = vpop.f32.mrb[0].mxu0
        %v1299 = vadd.f32 0.0, %v1298
        %v1300 = vpop.f32.mrb[0].mxu0
        %v1301 = vpop.f32.mrb[0].mxu0
        %v1302 = vadd.f32 0.0, %v1301
        %v1303 = vpop.f32.mrb[0].mxu0
        %1304 = vdwg.mxu0
        %v1305 = vadd.f32 %v1187, %v1275
        %v1306 = vadd.f32 %v1188, %v1278
        %v1307 = vadd.f32 %v1189, %v1283
        %v1308 = vadd.f32 %v1190, %v1286
        %v1309 = vadd.f32 %v1191, %v1291
        %v1310 = vadd.f32 %v1192, %v1294
        %v1311 = vadd.f32 %v1193, %v1299
        %v1312 = vadd.f32 %v1194, %v1302
        %v1313 = vld [vmem:[%s256] sm:$0x1]
        %v1315 = vlaneseq
        %v1316 = vshrl.u32 %v1315, 7
        %v1317 = vsub.s32 0, %v1316
        %v1318 = vrot.slane %v1313, %v1317
        %v1320 = vmul.f32 %v1305, %v1318
        %v1321 = vmul.f32 %v1306, %v1318
        %v1322 = vmul.f32 %v1307, %v1318
        %v1323 = vmul.f32 %v1308, %v1318
        %v1324 = vmul.f32 %v1309, %v1318
        %v1325 = vmul.f32 %v1310, %v1318
        %v1326 = vmul.f32 %v1311, %v1318
        %v1327 = vmul.f32 %v1312, %v1318
        %v1328 = vld [vmem:[%s259] sm:$0x1]
        %v1330 = vlaneseq
        %v1331 = vshrl.u32 %v1330, 7
        %v1332 = vsub.s32 0, %v1331
        %v1333 = vrot.slane %v1328, %v1332
        %v1335 = vadd.f32 %v1320, %v1333
        %v1336 = vadd.f32 %v1321, %v1333
        %v1337 = vadd.f32 %v1322, %v1333
        %v1338 = vadd.f32 %v1323, %v1333
        %v1339 = vadd.f32 %v1324, %v1333
        %v1340 = vadd.f32 %v1325, %v1333
        %v1341 = vadd.f32 %v1326, %v1333
        %v1342 = vadd.f32 %v1327, %v1333
        %v1343 = vmax.f32 %v1335, 0.0
        %v1344 = vmax.f32 %v1336, 0.0
        %v1345 = vmax.f32 %v1337, 0.0
        %v1346 = vmax.f32 %v1338, 0.0
        %v1347 = vmax.f32 %v1339, 0.0
        %v1348 = vmax.f32 %v1340, 0.0
        %v1349 = vmax.f32 %v1341, 0.0
        %v1350 = vmax.f32 %v1342, 0.0
        %1351 = vst [vmem:[%s242] sm:$0xff] %v1343
        %1352 = vst [vmem:[%s242 + $0x8] sm:$0xff] %v1344
        %1353 = vst [vmem:[%s242 + $0x10] sm:$0xff] %v1345
        %1354 = vst [vmem:[%s242 + $0x18] sm:$0xff] %v1346
        %1355 = vst [vmem:[%s242 + $0x20] sm:$0xff] %v1347
        %1356 = vst [vmem:[%s242 + $0x28] sm:$0xff] %v1348
        %1357 = vst [vmem:[%s242 + $0x30] sm:$0xff] %v1349
        %1358 = vst [vmem:[%s242 + $0x38] sm:$0xff] %v1350
        %s1359 = sand.u32 %s144, 1
        %s1360 = scalar_lea.sflag [#allocation3], %s1359
        %s1361 = sand.u32 %s144, 1
        %s1362 = smul.addr %s1361, 64
        %s1363 = scalar_lea.vmem [#allocation2], %s1362
        // Predicated region
        $region37: #{tpu_custom_call.1} parent=35 // pred_check
          %p1364 = pneg %p154
        $region38: #{tpu_custom_call.1} parent=35 // pred_check_branch
          %1366 = sbr.rel (%p1364) target = $region40
        $region39: #{tpu_custom_call.1} parent=35 // pred_region
          %s1368 = ssub.s32 1024, 1024
          %1369 = vsyncadd %s1360, %s1368
          %s1370 = smul.addr %s22, 8
          %s1371 = sadd.s32 %s23, %s1370
          %s1372 = smul.addr %s1371, 128
          %s1373 = scalar_lea.hbm %s4, %s1372
          %s1374 = sshll.u32 %s1363, 4
          %s1375 = int_to_ptr.vmem [resolvable:$true] %s1374
          %1380 = dma.vmem_to_hbm [thread:$0]  %s1375, 1024, %s1373, %s1360, 128, 128, 8
        $region40: #{tpu_custom_call.1} parent=35 // pred_fallthru
          _
      $region36: #{tpu_custom_call.1} parent=5 // pred_fallthru
        _
      %p1381 = scmp.le.s32.totalorder 2, %s13
      // Predicated region
      $region41: #{tpu_custom_call.1} parent=5 // pred_check
        %p1382 = pneg %p1381
      $region42: #{tpu_custom_call.1} parent=5 // pred_check_branch
        %1384 = sbr.rel (%p1382) target = $region44
      $region43: #{tpu_custom_call.1} parent=5 // pred_region
        %s1385 = ssub.s32 %s13, 2
        // Predicated region
        $region45: #{tpu_custom_call.1} parent=43 // pred_check
          %p1386 = pneg %p160
        $region46: #{tpu_custom_call.1} parent=43 // pred_check_branch
          %1388 = sbr.rel (%p1386) target = $region48
        $region47: #{tpu_custom_call.1} parent=43 // pred_region
          %s1389 = sand.u32 %s145, 1
          %s1390 = scalar_lea.sflag [#allocation3], %s1389
          %s1391 = sand.u32 %s145, 1
          %s1392 = smul.addr %s1391, 64
          %s1393 = scalar_lea.vmem [#allocation2], %s1392
          %1394 = dma.done %s1390, 1024
        $region48: #{tpu_custom_call.1} parent=43 // pred_fallthru
          _
      $region44: #{tpu_custom_call.1} parent=5 // pred_fallthru
        _
    $region6: #{tpu_custom_call.1} parent=1 // loop_footer
      %s17 = sadd.s32 1, %s13
    $region7: #{tpu_custom_call.1} parent=1 // loop_footer_branch
      %12 = sbr.rel target = $region3
    $region8: #{tpu_custom_call.1} parent=1 // loop_exit
      _
    %1395 = vsyncpa [#allocation3], 1
    %s1396 = scalar_lea.sflag [#allocation3], 1
    %1397 = vsyncpa %s1396, 1

</llo_original>
